<compile_context>
chip_gen: v5e
topology: v5e:2x2
jax: 0.10.0
libtpu: 0.0.40
codegen_flags: <defaults>
</compile_context>

<pallas_src>
import math

import jax
import jax.numpy as jnp
from jax.experimental import pallas as pl
from jax.experimental.pallas import tpu as pltpu

HIDDEN = 320          # logical nn.RNN hidden size (PyTorch)
HPAD = 384            # padded to a multiple of 128 for lane-dense tiles


# ----------------------------------------------------------------------------
# Fused kernel: streamed input projection + recurrence + classifier head.
# One grid step handles one (batch-block, time-chunk) pair.
# ----------------------------------------------------------------------------
def fused_rnn_head_kernel(x_ref, wih_ref, whh_ref, bias_ref,
                          whead_ref, bhead_ref, out_ref, h_ref):
    """
    x_ref    : (BB, TS, D)   current time-chunk of last_hidden_state
    wih_ref  : (D, HPAD)     input->hidden weight (pre-transposed, zero-padded)
    whh_ref  : (HPAD, HPAD)  hidden->hidden weight (zero-padded)
    bias_ref : (1, HPAD)     b_ih + b_hh
    whead_ref: (HPAD, C)     collapsed classifier weight  W1 @ W2 @ W3
    bhead_ref: (1, C)        collapsed classifier bias
    out_ref  : (BB, C)       softmax probabilities (written on the last chunk)
    h_ref    : (BB, HPAD)    persistent hidden-state scratch
    """
    t = pl.program_id(1)

    @pl.when(t == 0)
    def _init():
        h_ref[...] = jnp.zeros_like(h_ref)

    ts = x_ref.shape[1]
    wih = wih_ref[...]
    whh = whh_ref[...]
    bias = bias_ref[...]

    h = h_ref[...]
    # Statically unrolled chunk recurrence (partial unroll; the time grid
    # bounds total code size — S never gets fully unrolled).
    for i in range(ts):
        h = jnp.tanh(
            jnp.dot(x_ref[:, i, :], wih, preferred_element_type=jnp.float32)
            + jnp.dot(h, whh, preferred_element_type=jnp.float32)
            + bias
        )
    h_ref[...] = h

    @pl.when(t == pl.num_programs(1) - 1)
    def _finalize():
        # Dropout(0.5) is identity at inference; the 3 fc layers are collapsed
        # into one affine map (no nonlinearity between them).
        y = (jnp.dot(h, whead_ref[...], preferred_element_type=jnp.float32)
             + bhead_ref[...])
        y = y - jnp.max(y, axis=-1, keepdims=True)   # stable softmax (dim=1)
        e = jnp.exp(y)
        out_ref[...] = e / jnp.sum(e, axis=-1, keepdims=True)


# ----------------------------------------------------------------------------
# Parameter preparation: pad 320 -> 384 (zero padding => results unchanged)
# and collapse the activation-free Linear(320,80)->Linear(80,20)->Linear(20,C).
# ----------------------------------------------------------------------------
def prepare_params(params):
    D = params["w_ih_t"].shape[0]
    f32 = jnp.float32
    wih = jnp.zeros((D, HPAD), f32).at[:, :HIDDEN].set(params["w_ih_t"])
    whh = jnp.zeros((HPAD, HPAD), f32).at[:HIDDEN, :HIDDEN].set(params["w_hh_t"])
    bias = jnp.zeros((1, HPAD), f32).at[:, :HIDDEN].set(params["rnn_bias"])
    # Collapse the 3-layer head into one (320, C) affine map.
    w_head = params["w1"] @ params["w2"] @ params["w3"]
    b_head = (params["b1"] @ params["w2"] + params["b2"]) @ params["w3"] + params["b3"]
    w_head_pad = jnp.zeros((HPAD, w_head.shape[1]), f32).at[:HIDDEN, :].set(w_head)
    return dict(w_ih=wih, w_hh=whh, bias=bias, w_head=w_head_pad, b_head=b_head)


def _pick_time_chunk(S, max_chunk=64):
    # Largest sublane-aligned divisor of S (keeps the chunked x block legal
    # and bounds per-chunk VMEM for v7x); fall back to one full-S chunk.
    for ts in (64, 32, 16, 8):
        if ts <= max_chunk and S % ts == 0:
            return ts
    return S


# ----------------------------------------------------------------------------
# Full forward pass (single fused pallas_call)
# ----------------------------------------------------------------------------
def rnn_model_forward(cls_feats, params, *, time_chunk=None):
    B, S, D = cls_feats.shape
    pp = prepare_params(params)
    C = pp["b_head"].shape[1]

    # Sublane-pad the batch (zero rows; they are dropped from the output).
    Bp = ((B + 7) // 8) * 8
    x = cls_feats.astype(jnp.float32)
    if Bp != B:
        x = jnp.zeros((Bp, S, D), jnp.float32).at[:B].set(x)

    ts = time_chunk if time_chunk is not None else _pick_time_chunk(S)
    assert S % ts == 0, "sequence length must be a multiple of the time chunk"
    bb = math.gcd(Bp, 128)                  # sublane-aligned batch block
    grid = (Bp // bb, S // ts)              # (parallel batch, serial time)

    out = pl.pallas_call(
        fused_rnn_head_kernel,
        out_shape=jax.ShapeDtypeStruct((Bp, C), jnp.float32),
        grid=grid,
        in_specs=[
            # streamed x chunks, read straight from the batch-major layout
            pl.BlockSpec((bb, ts, D), lambda b, t: (b, t, 0)),
            # weights: constant block index => resident in VMEM, DMA'd once
            pl.BlockSpec((D, HPAD), lambda b, t: (0, 0)),
            pl.BlockSpec((HPAD, HPAD), lambda b, t: (0, 0)),
            pl.BlockSpec((1, HPAD), lambda b, t: (0, 0)),
            pl.BlockSpec((HPAD, C), lambda b, t: (0, 0)),
            pl.BlockSpec((1, C), lambda b, t: (0, 0)),
        ],
        out_specs=pl.BlockSpec((bb, C), lambda b, t: (b, 0)),
        scratch_shapes=[pltpu.VMEM((bb, HPAD), jnp.float32)],   # persistent h
        compiler_params=pltpu.CompilerParams(
            dimension_semantics=("parallel", "arbitrary"),
            vmem_limit_bytes=32 * 1024 * 1024,
        ),
        cost_estimate=pl.CostEstimate(
            flops=2 * Bp * S * (D * HPAD + HPAD * HPAD) + 2 * Bp * HPAD * C,
            transcendentals=Bp * S * HPAD + Bp * C,
            bytes_accessed=4 * (Bp * S * D + D * HPAD + HPAD * HPAD + HPAD
                                + HPAD * C + C + Bp * C),
        ),
    )(x, pp["w_ih"], pp["w_hh"], pp["bias"], pp["w_head"], pp["b_head"])
    return out[:B]


# ----------------------------------------------------------------------------
# Pure-JAX reference, faithful to the PyTorch module (unpadded, 3-layer head)
# ----------------------------------------------------------------------------
def rnn_model_reference(cls_feats, params):
    B, S, D = cls_feats.shape
    h = jnp.zeros((B, HIDDEN), jnp.float32)
    for t in range(S):
        h = jnp.tanh(
            cls_feats[:, t, :] @ params["w_ih_t"]
            + h @ params["w_hh_t"]
            + params["rnn_bias"]
        )
    y = h @ params["w1"] + params["b1"]
    y = y @ params["w2"] + params["b2"]
    y = y @ params["w3"] + params["b3"]
    return jax.nn.softmax(y, axis=1)


def init_params(key, input_size, num_classes):
    ks = jax.random.split(key, 10)
    scale = 0.05
    return {
        # RNN weights stored pre-transposed: (in, out)
        "w_ih_t": scale * jax.random.normal(ks[0], (input_size, HIDDEN), jnp.float32),
        "w_hh_t": scale * jax.random.normal(ks[1], (HIDDEN, HIDDEN), jnp.float32),
        "rnn_bias": scale * jax.random.normal(ks[2], (1, HIDDEN), jnp.float32),  # b_ih + b_hh
        "w1": scale * jax.random.normal(ks[3], (HIDDEN, 80), jnp.float32),
        "b1": scale * jax.random.normal(ks[4], (1, 80), jnp.float32),
        "w2": scale * jax.random.normal(ks[5], (80, 20), jnp.float32),
        "b2": scale * jax.random.normal(ks[6], (1, 20), jnp.float32),
        "w3": scale * jax.random.normal(ks[7], (20, num_classes), jnp.float32),
        "b3": scale * jax.random.normal(ks[8], (1, num_classes), jnp.float32),
    }


if __name__ == "__main__":
    B, S, D = 2, 16, 32          # batch, seq len, input_size (small demo shapes)
    NUM_CLASSES = 4

    key = jax.random.PRNGKey(0)
    k_x, k_p = jax.random.split(key)
    # Synthetic base_model output (last_hidden_state)
    cls_feats = jax.random.normal(k_x, (B, S, D), jnp.float32)
    params = init_params(k_p, D, NUM_CLASSES)

    # time_chunk=8 -> 2 time chunks, exercising the streamed grid + persistent
    # h scratch + pl.when init/finalize path at demo scale.
    fwd = jax.jit(lambda x, p: rnn_model_forward(x, p, time_chunk=8))
    out = jax.block_until_ready(fwd(cls_feats, params))

    ref = rnn_model_reference(cls_feats, params)
    assert out.shape == (B, NUM_CLASSES)
    # Head collapse (W1@W2@W3) reassociates fp ops -> compare at 1e-4.
    assert jnp.allclose(out, ref, atol=1e-4, rtol=1e-4), "mismatch vs reference"
    assert jnp.allclose(jnp.sum(out, axis=1), 1.0, atol=1e-5)

    print("KERNEL_OK")
</pallas_src>

<mosaic_0001>
module attributes {stable_mosaic.version = 11 : i64} {
  func.func @fused_rnn_head_kernel(%arg0: i32, %arg1: i32, %arg2: memref<8x8x32xf32, #tpu.memory_space<vmem>>, %arg3: memref<32x384xf32, #tpu.memory_space<vmem>>, %arg4: memref<384x384xf32, #tpu.memory_space<vmem>>, %arg5: memref<1x384xf32, #tpu.memory_space<vmem>>, %arg6: memref<384x4xf32, #tpu.memory_space<vmem>>, %arg7: memref<1x4xf32, #tpu.memory_space<vmem>>, %arg8: memref<8x4xf32, #tpu.memory_space<vmem>>, %arg9: memref<8x384xf32, #tpu.memory_space<vmem>>) attributes {dimension_semantics = [#tpu.dimension_semantics<parallel>, #tpu.dimension_semantics<arbitrary>], iteration_bounds = array<i64: 1, 2>, scalar_prefetch = 0 : i64, scratch_operands = 1 : i64, tpu.core_type = #tpu.core_type<tc>, window_params = [{transform_indices = @transform_0, window_bounds = array<i64: 8, 8, 32>}, {pipeline_mode = #tpu.pipeline_mode<synchronous>, transform_indices = @transform_1, window_bounds = array<i64: 32, 384>}, {pipeline_mode = #tpu.pipeline_mode<synchronous>, transform_indices = @transform_2, window_bounds = array<i64: 384, 384>}, {pipeline_mode = #tpu.pipeline_mode<synchronous>, transform_indices = @transform_3, window_bounds = array<i64: 1, 384>}, {pipeline_mode = #tpu.pipeline_mode<synchronous>, transform_indices = @transform_4, window_bounds = array<i64: 384, 4>}, {pipeline_mode = #tpu.pipeline_mode<synchronous>, transform_indices = @transform_5, window_bounds = array<i64: 1, 4>}, {transform_indices = @transform_6, window_bounds = array<i64: 8, 4>}]} {
    %c0_i32 = arith.constant 0 : i32
    %0 = arith.cmpi eq, %arg1, %c0_i32 : i32
    %1 = arith.extui %0 : i1 to i32
    %c0_i32_0 = arith.constant 0 : i32
    %2 = arith.cmpi ne, %1, %c0_i32_0 : i32
    scf.if %2 {
      %cst_43 = arith.constant 0.000000e+00 : f32
      %75 = vector.broadcast %cst_43 : f32 to vector<8x384xf32>
      %c0_44 = arith.constant 0 : index
      %c0_45 = arith.constant 0 : index
      %76 = vector.load %arg9[%c0_44, %c0_45] : memref<8x384xf32, #tpu.memory_space<vmem>>, vector<8x384xf32>
      tpu.vector_store %arg9[%c0_44, %c0_45], %75 {strides = array<i32>} : memref<8x384xf32, #tpu.memory_space<vmem>>, vector<8x384xf32>,
    } else {
    }
    %c0 = arith.constant 0 : index
    %c0_1 = arith.constant 0 : index
    %3 = vector.load %arg3[%c0, %c0_1] : memref<32x384xf32, #tpu.memory_space<vmem>>, vector<32x384xf32>
    %c0_2 = arith.constant 0 : index
    %c0_3 = arith.constant 0 : index
    %4 = vector.load %arg4[%c0_2, %c0_3] : memref<384x384xf32, #tpu.memory_space<vmem>>, vector<384x384xf32>
    %c0_4 = arith.constant 0 : index
    %c0_5 = arith.constant 0 : index
    %5 = vector.load %arg5[%c0_4, %c0_5] : memref<1x384xf32, #tpu.memory_space<vmem>>, vector<1x384xf32>
    %c0_6 = arith.constant 0 : index
    %c0_7 = arith.constant 0 : index
    %6 = vector.load %arg9[%c0_6, %c0_7] : memref<8x384xf32, #tpu.memory_space<vmem>>, vector<8x384xf32>
    %c0_8 = arith.constant 0 : index
    %c0_9 = arith.constant 0 : index
    %c0_10 = arith.constant 0 : index
    %7 = vector.load %arg2[%c0_8, %c0_9, %c0_10] : memref<8x8x32xf32, #tpu.memory_space<vmem>>, vector<8x1x32xf32>
    %8 = vector.shape_cast %7 : vector<8x1x32xf32> to vector<8x32xf32>
    %cst = arith.constant dense<0.000000e+00> : vector<8x384xf32>
    %9 = tpu.matmul %8, %3, %cst {dimension_numbers = #tpu.dot_dimension_numbers<[1], [0], [0], [1], [0, 0, 1, 1], [], []>} : vector<8x32xf32>, vector<32x384xf32>, vector<8x384xf32> -> vector<8x384xf32>
    %cst_11 = arith.constant dense<0.000000e+00> : vector<8x384xf32>
    %10 = tpu.matmul %6, %4, %cst_11 {dimension_numbers = #tpu.dot_dimension_numbers<[1], [0], [0], [1], [0, 0, 1, 1], [], []>} : vector<8x384xf32>, vector<384x384xf32>, vector<8x384xf32> -> vector<8x384xf32>
    %11 = arith.addf %9, %10 : vector<8x384xf32>
    %12 = vector.broadcast %5 : vector<1x384xf32> to vector<8x384xf32>
    %13 = arith.addf %11, %12 : vector<8x384xf32>
    %14 = math.tanh %13 : vector<8x384xf32>
    %c0_12 = arith.constant 0 : index
    %c1 = arith.constant 1 : index
    %c0_13 = arith.constant 0 : index
    %15 = vector.load %arg2[%c0_12, %c1, %c0_13] : memref<8x8x32xf32, #tpu.memory_space<vmem>>, vector<8x1x32xf32>
    %16 = vector.shape_cast %15 : vector<8x1x32xf32> to vector<8x32xf32>
    %cst_14 = arith.constant dense<0.000000e+00> : vector<8x384xf32>
    %17 = tpu.matmul %16, %3, %cst_14 {dimension_numbers = #tpu.dot_dimension_numbers<[1], [0], [0], [1], [0, 0, 1, 1], [], []>} : vector<8x32xf32>, vector<32x384xf32>, vector<8x384xf32> -> vector<8x384xf32>
    %cst_15 = arith.constant dense<0.000000e+00> : vector<8x384xf32>
    %18 = tpu.matmul %14, %4, %cst_15 {dimension_numbers = #tpu.dot_dimension_numbers<[1], [0], [0], [1], [0, 0, 1, 1], [], []>} : vector<8x384xf32>, vector<384x384xf32>, vector<8x384xf32> -> vector<8x384xf32>
    %19 = arith.addf %17, %18 : vector<8x384xf32>
    %20 = vector.broadcast %5 : vector<1x384xf32> to vector<8x384xf32>
    %21 = arith.addf %19, %20 : vector<8x384xf32>
    %22 = math.tanh %21 : vector<8x384xf32>
    %c0_16 = arith.constant 0 : index
    %c2 = arith.constant 2 : index
    %c0_17 = arith.constant 0 : index
    %23 = vector.load %arg2[%c0_16, %c2, %c0_17] : memref<8x8x32xf32, #tpu.memory_space<vmem>>, vector<8x1x32xf32>
    %24 = vector.shape_cast %23 : vector<8x1x32xf32> to vector<8x32xf32>
    %cst_18 = arith.constant dense<0.000000e+00> : vector<8x384xf32>
    %25 = tpu.matmul %24, %3, %cst_18 {dimension_numbers = #tpu.dot_dimension_numbers<[1], [0], [0], [1], [0, 0, 1, 1], [], []>} : vector<8x32xf32>, vector<32x384xf32>, vector<8x384xf32> -> vector<8x384xf32>
    %cst_19 = arith.constant dense<0.000000e+00> : vector<8x384xf32>
    %26 = tpu.matmul %22, %4, %cst_19 {dimension_numbers = #tpu.dot_dimension_numbers<[1], [0], [0], [1], [0, 0, 1, 1], [], []>} : vector<8x384xf32>, vector<384x384xf32>, vector<8x384xf32> -> vector<8x384xf32>
    %27 = arith.addf %25, %26 : vector<8x384xf32>
    %28 = vector.broadcast %5 : vector<1x384xf32> to vector<8x384xf32>
    %29 = arith.addf %27, %28 : vector<8x384xf32>
    %30 = math.tanh %29 : vector<8x384xf32>
    %c0_20 = arith.constant 0 : index
    %c3 = arith.constant 3 : index
    %c0_21 = arith.constant 0 : index
    %31 = vector.load %arg2[%c0_20, %c3, %c0_21] : memref<8x8x32xf32, #tpu.memory_space<vmem>>, vector<8x1x32xf32>
    %32 = vector.shape_cast %31 : vector<8x1x32xf32> to vector<8x32xf32>
    %cst_22 = arith.constant dense<0.000000e+00> : vector<8x384xf32>
    %33 = tpu.matmul %32, %3, %cst_22 {dimension_numbers = #tpu.dot_dimension_numbers<[1], [0], [0], [1], [0, 0, 1, 1], [], []>} : vector<8x32xf32>, vector<32x384xf32>, vector<8x384xf32> -> vector<8x384xf32>
    %cst_23 = arith.constant dense<0.000000e+00> : vector<8x384xf32>
    %34 = tpu.matmul %30, %4, %cst_23 {dimension_numbers = #tpu.dot_dimension_numbers<[1], [0], [0], [1], [0, 0, 1, 1], [], []>} : vector<8x384xf32>, vector<384x384xf32>, vector<8x384xf32> -> vector<8x384xf32>
    %35 = arith.addf %33, %34 : vector<8x384xf32>
    %36 = vector.broadcast %5 : vector<1x384xf32> to vector<8x384xf32>
    %37 = arith.addf %35, %36 : vector<8x384xf32>
    %38 = math.tanh %37 : vector<8x384xf32>
    %c0_24 = arith.constant 0 : index
    %c4 = arith.constant 4 : index
    %c0_25 = arith.constant 0 : index
    %39 = vector.load %arg2[%c0_24, %c4, %c0_25] : memref<8x8x32xf32, #tpu.memory_space<vmem>>, vector<8x1x32xf32>
    %40 = vector.shape_cast %39 : vector<8x1x32xf32> to vector<8x32xf32>
    %cst_26 = arith.constant dense<0.000000e+00> : vector<8x384xf32>
    %41 = tpu.matmul %40, %3, %cst_26 {dimension_numbers = #tpu.dot_dimension_numbers<[1], [0], [0], [1], [0, 0, 1, 1], [], []>} : vector<8x32xf32>, vector<32x384xf32>, vector<8x384xf32> -> vector<8x384xf32>
    %cst_27 = arith.constant dense<0.000000e+00> : vector<8x384xf32>
    %42 = tpu.matmul %38, %4, %cst_27 {dimension_numbers = #tpu.dot_dimension_numbers<[1], [0], [0], [1], [0, 0, 1, 1], [], []>} : vector<8x384xf32>, vector<384x384xf32>, vector<8x384xf32> -> vector<8x384xf32>
    %43 = arith.addf %41, %42 : vector<8x384xf32>
    %44 = vector.broadcast %5 : vector<1x384xf32> to vector<8x384xf32>
    %45 = arith.addf %43, %44 : vector<8x384xf32>
    %46 = math.tanh %45 : vector<8x384xf32>
    %c0_28 = arith.constant 0 : index
    %c5 = arith.constant 5 : index
    %c0_29 = arith.constant 0 : index
    %47 = vector.load %arg2[%c0_28, %c5, %c0_29] : memref<8x8x32xf32, #tpu.memory_space<vmem>>, vector<8x1x32xf32>
    %48 = vector.shape_cast %47 : vector<8x1x32xf32> to vector<8x32xf32>
    %cst_30 = arith.constant dense<0.000000e+00> : vector<8x384xf32>
    %49 = tpu.matmul %48, %3, %cst_30 {dimension_numbers = #tpu.dot_dimension_numbers<[1], [0], [0], [1], [0, 0, 1, 1], [], []>} : vector<8x32xf32>, vector<32x384xf32>, vector<8x384xf32> -> vector<8x384xf32>
    %cst_31 = arith.constant dense<0.000000e+00> : vector<8x384xf32>
    %50 = tpu.matmul %46, %4, %cst_31 {dimension_numbers = #tpu.dot_dimension_numbers<[1], [0], [0], [1], [0, 0, 1, 1], [], []>} : vector<8x384xf32>, vector<384x384xf32>, vector<8x384xf32> -> vector<8x384xf32>
    %51 = arith.addf %49, %50 : vector<8x384xf32>
    %52 = vector.broadcast %5 : vector<1x384xf32> to vector<8x384xf32>
    %53 = arith.addf %51, %52 : vector<8x384xf32>
    %54 = math.tanh %53 : vector<8x384xf32>
    %c0_32 = arith.constant 0 : index
    %c6 = arith.constant 6 : index
    %c0_33 = arith.constant 0 : index
    %55 = vector.load %arg2[%c0_32, %c6, %c0_33] : memref<8x8x32xf32, #tpu.memory_space<vmem>>, vector<8x1x32xf32>
    %56 = vector.shape_cast %55 : vector<8x1x32xf32> to vector<8x32xf32>
    %cst_34 = arith.constant dense<0.000000e+00> : vector<8x384xf32>
    %57 = tpu.matmul %56, %3, %cst_34 {dimension_numbers = #tpu.dot_dimension_numbers<[1], [0], [0], [1], [0, 0, 1, 1], [], []>} : vector<8x32xf32>, vector<32x384xf32>, vector<8x384xf32> -> vector<8x384xf32>
    %cst_35 = arith.constant dense<0.000000e+00> : vector<8x384xf32>
    %58 = tpu.matmul %54, %4, %cst_35 {dimension_numbers = #tpu.dot_dimension_numbers<[1], [0], [0], [1], [0, 0, 1, 1], [], []>} : vector<8x384xf32>, vector<384x384xf32>, vector<8x384xf32> -> vector<8x384xf32>
    %59 = arith.addf %57, %58 : vector<8x384xf32>
    %60 = vector.broadcast %5 : vector<1x384xf32> to vector<8x384xf32>
    %61 = arith.addf %59, %60 : vector<8x384xf32>
    %62 = math.tanh %61 : vector<8x384xf32>
    %c0_36 = arith.constant 0 : index
    %c7 = arith.constant 7 : index
    %c0_37 = arith.constant 0 : index
    %63 = vector.load %arg2[%c0_36, %c7, %c0_37] : memref<8x8x32xf32, #tpu.memory_space<vmem>>, vector<8x1x32xf32>
    %64 = vector.shape_cast %63 : vector<8x1x32xf32> to vector<8x32xf32>
    %cst_38 = arith.constant dense<0.000000e+00> : vector<8x384xf32>
    %65 = tpu.matmul %64, %3, %cst_38 {dimension_numbers = #tpu.dot_dimension_numbers<[1], [0], [0], [1], [0, 0, 1, 1], [], []>} : vector<8x32xf32>, vector<32x384xf32>, vector<8x384xf32> -> vector<8x384xf32>
    %cst_39 = arith.constant dense<0.000000e+00> : vector<8x384xf32>
    %66 = tpu.matmul %62, %4, %cst_39 {dimension_numbers = #tpu.dot_dimension_numbers<[1], [0], [0], [1], [0, 0, 1, 1], [], []>} : vector<8x384xf32>, vector<384x384xf32>, vector<8x384xf32> -> vector<8x384xf32>
    %67 = arith.addf %65, %66 : vector<8x384xf32>
    %68 = vector.broadcast %5 : vector<1x384xf32> to vector<8x384xf32>
    %69 = arith.addf %67, %68 : vector<8x384xf32>
    %70 = math.tanh %69 : vector<8x384xf32>
    %c0_40 = arith.constant 0 : index
    %c0_41 = arith.constant 0 : index
    %71 = vector.load %arg9[%c0_40, %c0_41] : memref<8x384xf32, #tpu.memory_space<vmem>>, vector<8x384xf32>
    tpu.vector_store %arg9[%c0_40, %c0_41], %70 {strides = array<i32>} : memref<8x384xf32, #tpu.memory_space<vmem>>, vector<8x384xf32>,
    %c1_i32 = arith.constant 1 : i32
    %72 = arith.cmpi eq, %arg1, %c1_i32 : i32
    %73 = arith.extui %72 : i1 to i32
    %c0_i32_42 = arith.constant 0 : i32
    %74 = arith.cmpi ne, %73, %c0_i32_42 : i32
    scf.if %74 {
      %c0_43 = arith.constant 0 : index
      %c0_44 = arith.constant 0 : index
      %75 = vector.load %arg6[%c0_43, %c0_44] : memref<384x4xf32, #tpu.memory_space<vmem>>, vector<384x4xf32>
      %cst_45 = arith.constant dense<0.000000e+00> : vector<8x4xf32>
      %76 = tpu.matmul %70, %75, %cst_45 {dimension_numbers = #tpu.dot_dimension_numbers<[1], [0], [0], [1], [0, 0, 1, 1], [], []>} : vector<8x384xf32>, vector<384x4xf32>, vector<8x4xf32> -> vector<8x4xf32>
      %c0_46 = arith.constant 0 : index
      %c0_47 = arith.constant 0 : index
      %77 = vector.load %arg7[%c0_46, %c0_47] : memref<1x4xf32, #tpu.memory_space<vmem>>, vector<1x4xf32>
      %78 = vector.broadcast %77 : vector<1x4xf32> to vector<8x4xf32>
      %79 = arith.addf %76, %78 : vector<8x4xf32>
      %cst_48 = arith.constant dense<0xFF800000> : vector<8xf32>
      %80 = vector.multi_reduction <maximumf>, %79, %cst_48 [1] : vector<8x4xf32> to vector<8xf32>
      %81 = vector.shape_cast %80 : vector<8xf32> to vector<8x1xf32>
      %82 = vector.broadcast %81 : vector<8x1xf32> to vector<8x4xf32>
      %83 = arith.subf %79, %82 : vector<8x4xf32>
      %84 = math.exp %83 : vector<8x4xf32>
      %cst_49 = arith.constant dense<0.000000e+00> : vector<8xf32>
      %85 = vector.multi_reduction <add>, %84, %cst_49 [1] : vector<8x4xf32> to vector<8xf32>
      %86 = vector.shape_cast %85 : vector<8xf32> to vector<8x1xf32>
      %87 = vector.broadcast %86 : vector<8x1xf32> to vector<8x4xf32>
      %88 = arith.divf %84, %87 : vector<8x4xf32>
      %c0_50 = arith.constant 0 : index
      %c0_51 = arith.constant 0 : index
      %89 = vector.load %arg8[%c0_50, %c0_51] : memref<8x4xf32, #tpu.memory_space<vmem>>, vector<8x4xf32>
      tpu.vector_store %arg8[%c0_50, %c0_51], %88 {strides = array<i32>} : memref<8x4xf32, #tpu.memory_space<vmem>>, vector<8x4xf32>,
    } else {
    }
    return
  }
  func.func @transform_0(%arg0: i32, %arg1: i32) -> (i32, i32, i32) {
    %c0_i32 = arith.constant 0 : i32
    %c0_i32_0 = arith.constant 0 : i32
    return %arg0, %arg1, %c0_i32 : i32, i32, i32
  }
  func.func @transform_1(%arg0: i32, %arg1: i32) -> (i32, i32) {
    %c0_i32 = arith.constant 0 : i32
    %c0_i32_0 = arith.constant 0 : i32
    %c0_i32_1 = arith.constant 0 : i32
    return %c0_i32, %c0_i32_0 : i32, i32
  }
  func.func @transform_2(%arg0: i32, %arg1: i32) -> (i32, i32) {
    %c0_i32 = arith.constant 0 : i32
    %c0_i32_0 = arith.constant 0 : i32
    %c0_i32_1 = arith.constant 0 : i32
    return %c0_i32, %c0_i32_0 : i32, i32
  }
  func.func @transform_3(%arg0: i32, %arg1: i32) -> (i32, i32) {
    %c0_i32 = arith.constant 0 : i32
    %c0_i32_0 = arith.constant 0 : i32
    %c0_i32_1 = arith.constant 0 : i32
    return %c0_i32, %c0_i32_0 : i32, i32
  }
  func.func @transform_4(%arg0: i32, %arg1: i32) -> (i32, i32) {
    %c0_i32 = arith.constant 0 : i32
    %c0_i32_0 = arith.constant 0 : i32
    %c0_i32_1 = arith.constant 0 : i32
    return %c0_i32, %c0_i32_0 : i32, i32
  }
  func.func @transform_5(%arg0: i32, %arg1: i32) -> (i32, i32) {
    %c0_i32 = arith.constant 0 : i32
    %c0_i32_0 = arith.constant 0 : i32
    %c0_i32_1 = arith.constant 0 : i32
    return %c0_i32, %c0_i32_0 : i32, i32
  }
  func.func @transform_6(%arg0: i32, %arg1: i32) -> (i32, i32) {
    %c0_i32 = arith.constant 0 : i32
    %c0_i32_0 = arith.constant 0 : i32
    return %arg0, %c0_i32 : i32, i32
  }
}

</mosaic_0001>

<llo_original>
// kernel: _lambda_.1
$region0: #{_lambda_.1}
  #allocation0 [shape = 'u32[]', space=smem, size = 0x4, offset = 0x4, fixed_abs, tag = 'smem constant byte address 0x4 - core index']
  #allocation1 [shape = 'u32[72,128]{1,0:T(1,128)}', space=vmem, size = 0x9000, scoped, tag = 'internal scratch']
  #allocation2 [shape = 'f32[8,384]{1,0:T(8,128)}', space=vmem, size = 0x3000, scoped, tag = 'scratch operand']
  %s0 = inlined_call_operand.vmem [shape: f32[8,16,32], index: 0, kind: input, shape index: {}]
  %s1 = inlined_call_operand.vmem [shape: f32[32,384], index: 1, kind: input, shape index: {}]
  %s2 = inlined_call_operand.vmem [shape: f32[384,384], index: 2, kind: input, shape index: {}]
  %s3 = inlined_call_operand.vmem [shape: f32[1,384], index: 3, kind: input, shape index: {}]
  %s4 = inlined_call_operand.vmem [shape: f32[384,4], index: 4, kind: input, shape index: {}]
  %s5 = inlined_call_operand.vmem [shape: f32[1,4], index: 5, kind: input, shape index: {}]
  %s6 = inlined_call_operand.vmem [shape: f32[8,4], index: 6, kind: output, shape index: {}]
  %s7 = sld [smem:[#allocation0]]
  $region103: #{_lambda_.1} parent=0
    _
  %s9 = ssub.s32 1, %s7
  %s10 = scalar_select 0, %s9, %s7
  $region1: #{_lambda_.1} parent=0
    #allocation3 [shape = 'u8[65536]{0}', space=vmem, size = 0x10000, scoped, tag = 'input window, operand 0']
    loop: start=0, step=1, limit=4
    $region2: #{_lambda_.1} parent=1 // loop_pre_header
      _
    $region3: #{_lambda_.1} parent=1 // loop_header
      %s12 = sphi 0, %s16
      %p13 = scmp.ge.s32.totalorder %s12, 4
      %s19 = sphi 0, %s31
      %s20 = sphi 0, %s27
      %s21 = sphi 0, %s19
      %s22 = sphi 0, %s20
      %s23 = sphi 0, %s21
      %s24 = sphi 0, %s22
      %s36 = sphi 0, %s38
      %s39 = sphi 0, %s36
      %s40 = sphi 0, %s39
      %s56 = sphi 0, %s40
      %s60 = sphi 0, %s60
      %s62 = sphi 0, %s60
      %s63 = sphi 0, %s62
      %s77 = sphi 0, %s63
      %s81 = sphi 0, %s81
      %s83 = sphi 0, %s81
      %s84 = sphi 0, %s83
      %s98 = sphi 0, %s84
      %s102 = sphi 0, %s102
      %s104 = sphi 0, %s102
      %s105 = sphi 0, %s104
      %s119 = sphi 0, %s105
      %s123 = sphi 0, %s123
      %s125 = sphi 0, %s123
      %s126 = sphi 0, %s125
      %s140 = sphi 0, %s126
      %s144 = sphi 0, %s144
      %s146 = sphi 0, %s144
      %s147 = sphi 0, %s146
      %s161 = sphi 0, %s147
      %s167 = sphi 0, %s169
      %s170 = sphi 0, %s167
      %s171 = sphi 0, %s170
      %s187 = sphi 0, %s171
    $region4: #{_lambda_.1} parent=1 // loop_header_branch
      %15 = sbr.rel (%p13) target = $region8
    $region5: #{_lambda_.1} parent=1 // loop_body
      %s17 = ssub.s32 %s12, 1
      %s18 = ssub.s32 %s12, 2
      %s25 = sadd.s32 1, %s20
      %p26 = scmp.ge.s32.totalorder %s25, 2
      %s27 = scalar_select %p26, 0, %s25
      %s28 = sadd.s32 1, %s19
      %s29 = scalar_select %p26, %s28, %s19
      %p30 = scmp.ge.s32.totalorder %s29, 1
      %s31 = scalar_select %p30, 0, %s29
      %s32 = ssub.s32 %s19, %s31
      %s33 = ssub.s32 %s20, %s27
      %s34 = sor.u32 %s32, %s33
      %p35 = scmp.eq.s32.totalorder %s34, 0
      %s37 = sadd.s32 %s36, 1
      %s38 = scalar_select %p35, %s36, %s37
      %p41 = pneg %p35
      %p42 = scmp.eq.s32.totalorder %s12, 1
      %p43 = por %p41, %p42
      %p44 = scmp.ne.s32.totalorder %s36, %s39
      %p45 = scmp.eq.s32.totalorder %s12, 0
      %p46 = por %p44, %p45
      %p47 = scmp.ne.s32.totalorder %s36, %s39
      %p48 = scmp.eq.s32.totalorder %s17, 1
      %p49 = por %p47, %p48
      %p50 = scmp.ne.s32.totalorder %s39, %s40
      %p51 = scmp.eq.s32.totalorder %s17, 0
      %p52 = por %p50, %p51
      %p53 = scmp.ne.s32.totalorder %s39, %s40
      %p54 = scmp.eq.s32.totalorder %s18, 1
      %p55 = por %p53, %p54
      %p57 = scmp.ne.s32.totalorder %s40, %s56
      %p58 = scmp.eq.s32.totalorder %s18, 0
      %p59 = por %p57, %p58
      %s61 = sadd.s32 %s60, 1
      %p64 = scmp.eq.s32.totalorder %s12, 1
      %p65 = scmp.ne.s32.totalorder %s60, %s62
      %p66 = scmp.eq.s32.totalorder %s12, 0
      %p67 = por %p65, %p66
      %p68 = scmp.ne.s32.totalorder %s60, %s62
      %p69 = scmp.eq.s32.totalorder %s17, 1
      %p70 = por %p68, %p69
      %p71 = scmp.ne.s32.totalorder %s62, %s63
      %p72 = scmp.eq.s32.totalorder %s17, 0
      %p73 = por %p71, %p72
      %p74 = scmp.ne.s32.totalorder %s62, %s63
      %p75 = scmp.eq.s32.totalorder %s18, 1
      %p76 = por %p74, %p75
      %p78 = scmp.ne.s32.totalorder %s63, %s77
      %p79 = scmp.eq.s32.totalorder %s18, 0
      %p80 = por %p78, %p79
      %s82 = sadd.s32 %s81, 1
      %p85 = scmp.eq.s32.totalorder %s12, 1
      %p86 = scmp.ne.s32.totalorder %s81, %s83
      %p87 = scmp.eq.s32.totalorder %s12, 0
      %p88 = por %p86, %p87
      %p89 = scmp.ne.s32.totalorder %s81, %s83
      %p90 = scmp.eq.s32.totalorder %s17, 1
      %p91 = por %p89, %p90
      %p92 = scmp.ne.s32.totalorder %s83, %s84
      %p93 = scmp.eq.s32.totalorder %s17, 0
      %p94 = por %p92, %p93
      %p95 = scmp.ne.s32.totalorder %s83, %s84
      %p96 = scmp.eq.s32.totalorder %s18, 1
      %p97 = por %p95, %p96
      %p99 = scmp.ne.s32.totalorder %s84, %s98
      %p100 = scmp.eq.s32.totalorder %s18, 0
      %p101 = por %p99, %p100
      %s103 = sadd.s32 %s102, 1
      %p106 = scmp.eq.s32.totalorder %s12, 1
      %p107 = scmp.ne.s32.totalorder %s102, %s104
      %p108 = scmp.eq.s32.totalorder %s12, 0
      %p109 = por %p107, %p108
      %p110 = scmp.ne.s32.totalorder %s102, %s104
      %p111 = scmp.eq.s32.totalorder %s17, 1
      %p112 = por %p110, %p111
      %p113 = scmp.ne.s32.totalorder %s104, %s105
      %p114 = scmp.eq.s32.totalorder %s17, 0
      %p115 = por %p113, %p114
      %p116 = scmp.ne.s32.totalorder %s104, %s105
      %p117 = scmp.eq.s32.totalorder %s18, 1
      %p118 = por %p116, %p117
      %p120 = scmp.ne.s32.totalorder %s105, %s119
      %p121 = scmp.eq.s32.totalorder %s18, 0
      %p122 = por %p120, %p121
      %s124 = sadd.s32 %s123, 1
      %p127 = scmp.eq.s32.totalorder %s12, 1
      %p128 = scmp.ne.s32.totalorder %s123, %s125
      %p129 = scmp.eq.s32.totalorder %s12, 0
      %p130 = por %p128, %p129
      %p131 = scmp.ne.s32.totalorder %s123, %s125
      %p132 = scmp.eq.s32.totalorder %s17, 1
      %p133 = por %p131, %p132
      %p134 = scmp.ne.s32.totalorder %s125, %s126
      %p135 = scmp.eq.s32.totalorder %s17, 0
      %p136 = por %p134, %p135
      %p137 = scmp.ne.s32.totalorder %s125, %s126
      %p138 = scmp.eq.s32.totalorder %s18, 1
      %p139 = por %p137, %p138
      %p141 = scmp.ne.s32.totalorder %s126, %s140
      %p142 = scmp.eq.s32.totalorder %s18, 0
      %p143 = por %p141, %p142
      %s145 = sadd.s32 %s144, 1
      %p148 = scmp.eq.s32.totalorder %s12, 1
      %p149 = scmp.ne.s32.totalorder %s144, %s146
      %p150 = scmp.eq.s32.totalorder %s12, 0
      %p151 = por %p149, %p150
      %p152 = scmp.ne.s32.totalorder %s144, %s146
      %p153 = scmp.eq.s32.totalorder %s17, 1
      %p154 = por %p152, %p153
      %p155 = scmp.ne.s32.totalorder %s146, %s147
      %p156 = scmp.eq.s32.totalorder %s17, 0
      %p157 = por %p155, %p156
      %p158 = scmp.ne.s32.totalorder %s146, %s147
      %p159 = scmp.eq.s32.totalorder %s18, 1
      %p160 = por %p158, %p159
      %p162 = scmp.ne.s32.totalorder %s147, %s161
      %p163 = scmp.eq.s32.totalorder %s18, 0
      %p164 = por %p162, %p163
      %s165 = ssub.s32 %s19, %s31
      %p166 = scmp.eq.s32.totalorder %s165, 0
      %s168 = sadd.s32 %s167, 1
      %s169 = scalar_select %p166, %s167, %s168
      %p172 = pneg %p166
      %p173 = scmp.eq.s32.totalorder %s12, 1
      %p174 = por %p172, %p173
      %p175 = scmp.ne.s32.totalorder %s167, %s170
      %p176 = scmp.eq.s32.totalorder %s12, 0
      %p177 = por %p175, %p176
      %p178 = scmp.ne.s32.totalorder %s167, %s170
      %p179 = scmp.eq.s32.totalorder %s17, 1
      %p180 = por %p178, %p179
      %p181 = scmp.ne.s32.totalorder %s170, %s171
      %p182 = scmp.eq.s32.totalorder %s17, 0
      %p183 = por %p181, %p182
      %p184 = scmp.ne.s32.totalorder %s170, %s171
      %p185 = scmp.eq.s32.totalorder %s18, 1
      %p186 = por %p184, %p185
      %p188 = scmp.ne.s32.totalorder %s171, %s187
      %p189 = scmp.eq.s32.totalorder %s18, 0
      %p190 = por %p188, %p189
      %p191 = scmp.le.s32.totalorder 1, %s12
      %p192 = scmp.lt.s32.totalorder %s12, 3
      %p193 = pnand %p191, %p192
      %p194 = pneg %p193
      // Predicated region
      $region9: #{_lambda_.1} parent=5 // pred_check
        _
      $region10: #{_lambda_.1} parent=5 // pred_check_branch
        %196 = sbr.rel (%p193) target = $region12
      $region11: #{_lambda_.1} parent=5 // pred_region
        %s197 = ssub.s32 %s12, 1
        // Predicated region
        $region13: #{_lambda_.1} parent=11 // pred_check
          %p198 = pneg %p73
        $region14: #{_lambda_.1} parent=11 // pred_check_branch
          %200 = sbr.rel (%p198) target = $region16
        $region15: #{_lambda_.1} parent=11 // pred_region
          _
        $region16: #{_lambda_.1} parent=11 // pred_fallthru
          _
        // Predicated region
        $region17: #{_lambda_.1} parent=11 // pred_check
          %p201 = pneg %p94
        $region18: #{_lambda_.1} parent=11 // pred_check_branch
          %203 = sbr.rel (%p201) target = $region20
        $region19: #{_lambda_.1} parent=11 // pred_region
          _
        $region20: #{_lambda_.1} parent=11 // pred_fallthru
          _
        // Predicated region
        $region21: #{_lambda_.1} parent=11 // pred_check
          %p204 = pneg %p115
        $region22: #{_lambda_.1} parent=11 // pred_check_branch
          %206 = sbr.rel (%p204) target = $region24
        $region23: #{_lambda_.1} parent=11 // pred_region
          _
        $region24: #{_lambda_.1} parent=11 // pred_fallthru
          _
        // Predicated region
        $region25: #{_lambda_.1} parent=11 // pred_check
          %p207 = pneg %p136
        $region26: #{_lambda_.1} parent=11 // pred_check_branch
          %209 = sbr.rel (%p207) target = $region28
        $region27: #{_lambda_.1} parent=11 // pred_region
          _
        $region28: #{_lambda_.1} parent=11 // pred_fallthru
          _
        // Predicated region
        $region29: #{_lambda_.1} parent=11 // pred_check
          %p210 = pneg %p157
        $region30: #{_lambda_.1} parent=11 // pred_check_branch
          %212 = sbr.rel (%p210) target = $region32
        $region31: #{_lambda_.1} parent=11 // pred_region
          _
        $region32: #{_lambda_.1} parent=11 // pred_fallthru
          _
      $region12: #{_lambda_.1} parent=5 // pred_fallthru
        _
      %p213 = scmp.lt.s32.totalorder %s12, 2
      // Predicated region
      $region33: #{_lambda_.1} parent=5 // pred_check
        %p214 = pneg %p213
      $region34: #{_lambda_.1} parent=5 // pred_check_branch
        %216 = sbr.rel (%p214) target = $region36
      $region35: #{_lambda_.1} parent=5 // pred_region
        // Predicated region
        $region37: #{_lambda_.1} parent=35 // pred_check
          %p217 = pneg %p46
        $region38: #{_lambda_.1} parent=35 // pred_check_branch
          %219 = sbr.rel (%p217) target = $region40
        $region39: #{_lambda_.1} parent=35 // pred_region
          %s220 = sand.u32 %s36, 1
          %s221 = sand.u32 %s36, 1
          %s222 = smul.addr %s221, 64
          %s223 = scalar_lea.vmem [#allocation3], %s222
          %s224 = smul.u32 8, %s19
          %s225 = smul.addr %s224, 2
          %s226 = sadd.s32 %s20, %s225
          %s227 = smul.addr %s226, 8
          %s228 = scalar_lea.vmem %s0, %s227
          // Predicated region
          $region41: #{_lambda_.1} parent=39 // pred_check
            _
          $region42: #{_lambda_.1} parent=39 // pred_check_branch
            %230 = sbr.rel (0) target = $region44
          $region43: #{_lambda_.1} parent=39 // pred_region
            // Predicated region
            $region45: #{_lambda_.1} parent=43 // pred_check
              _
            $region46: #{_lambda_.1} parent=43 // pred_check_branch
              %232 = sbr.rel (0) target = $region48
            $region47: #{_lambda_.1} parent=43 // pred_region
              // Predicated region
              $region60: #{_lambda_.1} parent=47 // pred_check
                _
              $region61: #{_lambda_.1} parent=47 // pred_check_branch
                %262 = sbr.rel (0) target = $region63
              $region62: #{_lambda_.1} parent=47 // pred_region
                loop: start=0, step=1, limit=1
                $region64: #{_lambda_.1} parent=62 // loop_pre_header
                  _
                $region65: #{_lambda_.1} parent=62 // loop_header
                  %s264 = sphi 0, %s268
                  %p265 = scmp.ge.s32.totalorder %s264, 1
                  %s269 = sphi %s228, %s228
                  %s270 = sphi %s223, %s223
                $region66: #{_lambda_.1} parent=62 // loop_header_branch
                  %267 = sbr.rel (%p265) target = $region70
                $region67: #{_lambda_.1} parent=62 // loop_body
                  %v271 = vld [vmem:[%s269] sm:$0xff]
                  %272 = vst [vmem:[%s270] sm:$0xff] %v271
                  %v273 = vld [vmem:[%s269 + $0x10] sm:$0xff]
                  %274 = vst [vmem:[%s270 + $0x8] sm:$0xff] %v273
                  %v275 = vld [vmem:[%s269 + $0x20] sm:$0xff]
                  %276 = vst [vmem:[%s270 + $0x10] sm:$0xff] %v275
                  %v277 = vld [vmem:[%s269 + $0x30] sm:$0xff]
                  %278 = vst [vmem:[%s270 + $0x18] sm:$0xff] %v277
                  %v279 = vld [vmem:[%s269 + $0x40] sm:$0xff]
                  %280 = vst [vmem:[%s270 + $0x20] sm:$0xff] %v279
                  %v281 = vld [vmem:[%s269 + $0x50] sm:$0xff]
                  %282 = vst [vmem:[%s270 + $0x28] sm:$0xff] %v281
                  %v283 = vld [vmem:[%s269 + $0x60] sm:$0xff]
                  %284 = vst [vmem:[%s270 + $0x30] sm:$0xff] %v283
                  %v285 = vld [vmem:[%s269 + $0x70] sm:$0xff]
                  %286 = vst [vmem:[%s270 + $0x38] sm:$0xff] %v285
                $region68: #{_lambda_.1} parent=62 // loop_footer
                  %s268 = sadd.s32 1, %s264
                $region69: #{_lambda_.1} parent=62 // loop_footer_branch
                  %263 = sbr.rel target = $region65
                $region70: #{_lambda_.1} parent=62 // loop_exit
                  _
              $region63: #{_lambda_.1} parent=47 // pred_fallthru
                _
              // Predicated region
              $region71: #{_lambda_.1} parent=47 // pred_check
                _
              $region72: #{_lambda_.1} parent=47 // pred_check_branch
                %288 = sbr.rel target = $region74
              $region73: #{_lambda_.1} parent=47 // pred_region
                _
              $region74: #{_lambda_.1} parent=47 // pred_fallthru
                _
            $region48: #{_lambda_.1} parent=43 // pred_fallthru
              _
            // Predicated region
            $region49: #{_lambda_.1} parent=43 // pred_check
              _
            $region50: #{_lambda_.1} parent=43 // pred_check_branch
              %234 = sbr.rel target = $region52
            $region51: #{_lambda_.1} parent=43 // pred_region
              %s236 = ssub.s32 256, 1
              loop: start=0, step=1, limit=1
              $region53: #{_lambda_.1} parent=51 // loop_pre_header
                _
              $region54: #{_lambda_.1} parent=51 // loop_header
                %s238 = sphi 0, %s242
                %p239 = scmp.ge.s32.totalorder %s238, 1
                %s243 = sphi %s228, %s228
                %s244 = sphi %s223, %s223
              $region55: #{_lambda_.1} parent=51 // loop_header_branch
                %241 = sbr.rel (%p239) target = $region59
              $region56: #{_lambda_.1} parent=51 // loop_body
                %v245 = vld [vmem:[%s243] sm:%s236]
                %246 = vst [vmem:[%s244] sm:%s236] %v245
                %v247 = vld [vmem:[%s243 + $0x10] sm:%s236]
                %248 = vst [vmem:[%s244 + $0x8] sm:%s236] %v247
                %v249 = vld [vmem:[%s243 + $0x20] sm:%s236]
                %250 = vst [vmem:[%s244 + $0x10] sm:%s236] %v249
                %v251 = vld [vmem:[%s243 + $0x30] sm:%s236]
                %252 = vst [vmem:[%s244 + $0x18] sm:%s236] %v251
                %v253 = vld [vmem:[%s243 + $0x40] sm:%s236]
                %254 = vst [vmem:[%s244 + $0x20] sm:%s236] %v253
                %v255 = vld [vmem:[%s243 + $0x50] sm:%s236]
                %256 = vst [vmem:[%s244 + $0x28] sm:%s236] %v255
                %v257 = vld [vmem:[%s243 + $0x60] sm:%s236]
                %258 = vst [vmem:[%s244 + $0x30] sm:%s236] %v257
                %v259 = vld [vmem:[%s243 + $0x70] sm:%s236]
                %260 = vst [vmem:[%s244 + $0x38] sm:%s236] %v259
              $region57: #{_lambda_.1} parent=51 // loop_footer
                %s242 = sadd.s32 1, %s238
              $region58: #{_lambda_.1} parent=51 // loop_footer_branch
                %237 = sbr.rel target = $region54
              $region59: #{_lambda_.1} parent=51 // loop_exit
                _
            $region52: #{_lambda_.1} parent=43 // pred_fallthru
              _
          $region44: #{_lambda_.1} parent=39 // pred_fallthru
            _
          %289 = vnop
        $region40: #{_lambda_.1} parent=35 // pred_fallthru
          _
      $region36: #{_lambda_.1} parent=5 // pred_fallthru
        _
      %p290 = scmp.le.s32.totalorder 1, %s12
      %p291 = scmp.lt.s32.totalorder %s12, 3
      %p292 = pnand %p290, %p291
      %p293 = pneg %p292
      // Predicated region
      $region75: #{_lambda_.1} parent=5 // pred_check
        _
      $region76: #{_lambda_.1} parent=5 // pred_check_branch
        %295 = sbr.rel (%p292) target = $region78
      $region77: #{_lambda_.1} parent=5 // pred_region
        %s296 = ssub.s32 %s12, 1
        %s297 = sand.u32 %s39, 1
        %s298 = sand.u32 %s39, 1
        %s299 = smul.addr %s298, 64
        %s300 = scalar_lea.vmem [#allocation3], %s299
        // Predicated region
        $region79: #{_lambda_.1} parent=77 // pred_check
          %p301 = pneg %p52
        $region80: #{_lambda_.1} parent=77 // pred_check_branch
          %303 = sbr.rel (%p301) target = $region82
        $region81: #{_lambda_.1} parent=77 // pred_region
          _
        $region82: #{_lambda_.1} parent=77 // pred_fallthru
          _
        %s304 = sand.u32 %s39, 1
        %s305 = sand.u32 %s39, 1
        %s306 = smul.addr %s305, 64
        %s307 = scalar_lea.vmem [#allocation3], %s306
        %p308 = pneg %p52
        %p309 = pneg %p49
        %p310 = pneg %p73
        %p311 = pneg %p70
        %p312 = pneg %p94
        %p313 = pneg %p91
        %p314 = pneg %p115
        %p315 = pneg %p112
        %p316 = pneg %p136
        %p317 = pneg %p133
        %p318 = pneg %p157
        %p319 = pneg %p154
        %p320 = pneg %p183
        %p321 = pneg %p180
        %p322 = scmp.lt.s32.totalorder %s21, 0
        %s323 = scalar_select %p322, %s21, 0
        %s324 = smul.addr %s323, 8
        %s325 = scalar_lea.vmem %s6, %s324
        %s326 = smul.u32 8, %s21
        %p327 = scmp.lt.s32.totalorder %s21, 0
        %s328 = scalar_select %p327, %s21, 0
        %s329 = smul.addr %s328, 8
        %s330 = scalar_lea.vmem %s6, %s329
        %p331 = scmp.eq.s32.totalorder %s22, 0
        // Predicated region
        $region83: #{_lambda_.1} parent=77 // pred_check
          %p332 = pneg %p331
        $region84: #{_lambda_.1} parent=77 // pred_check_branch
          %334 = sbr.rel (%p332) target = $region86
        $region85: #{_lambda_.1} parent=77 // pred_region
          %335 = vst [vmem:[#allocation2] sm:$0xff] 0.0
          %336 = vst [vmem:[#allocation2 + $0x8] sm:$0xff] 0.0
          %337 = vst [vmem:[#allocation2 + $0x10] sm:$0xff] 0.0
        $region86: #{_lambda_.1} parent=77 // pred_fallthru
          _
        %v338 = vld [vmem:[%s1] sm:$0xff]
        %v339 = vld [vmem:[%s1 + $0x8] sm:$0xff]
        %v340 = vld [vmem:[%s1 + $0x10] sm:$0xff]
        %v341 = vld [vmem:[%s1 + $0x18] sm:$0xff]
        %v342 = vld [vmem:[%s1 + $0x20] sm:$0xff]
        %v343 = vld [vmem:[%s1 + $0x28] sm:$0xff]
        %v344 = vld [vmem:[%s1 + $0x30] sm:$0xff]
        %v345 = vld [vmem:[%s1 + $0x38] sm:$0xff]
        %v346 = vld [vmem:[%s1 + $0x40] sm:$0xff]
        %v347 = vld [vmem:[%s1 + $0x48] sm:$0xff]
        %v348 = vld [vmem:[%s1 + $0x50] sm:$0xff]
        %v349 = vld [vmem:[%s1 + $0x58] sm:$0xff]
        %v350 = vld [vmem:[%s2] sm:$0xff]
        %v351 = vld [vmem:[%s2 + $0x8] sm:$0xff]
        %v352 = vld [vmem:[%s2 + $0x10] sm:$0xff]
        %v353 = vld [vmem:[%s2 + $0x18] sm:$0xff]
        %v354 = vld [vmem:[%s2 + $0x20] sm:$0xff]
        %v355 = vld [vmem:[%s2 + $0x28] sm:$0xff]
        %v356 = vld [vmem:[%s2 + $0x30] sm:$0xff]
        %v357 = vld [vmem:[%s2 + $0x38] sm:$0xff]
        %v358 = vld [vmem:[%s2 + $0x40] sm:$0xff]
        %v359 = vld [vmem:[%s2 + $0x48] sm:$0xff]
        %v360 = vld [vmem:[%s2 + $0x50] sm:$0xff]
        %v361 = vld [vmem:[%s2 + $0x58] sm:$0xff]
        %v362 = vld [vmem:[%s2 + $0x60] sm:$0xff]
        %v363 = vld [vmem:[%s2 + $0x68] sm:$0xff]
        %v364 = vld [vmem:[%s2 + $0x70] sm:$0xff]
        %v365 = vld [vmem:[%s2 + $0x78] sm:$0xff]
        %v366 = vld [vmem:[%s2 + $0x80] sm:$0xff]
        %v367 = vld [vmem:[%s2 + $0x88] sm:$0xff]
        %v368 = vld [vmem:[%s2 + $0x90] sm:$0xff]
        %v369 = vld [vmem:[%s2 + $0x98] sm:$0xff]
        %v370 = vld [vmem:[%s2 + $0xa0] sm:$0xff]
        %v371 = vld [vmem:[%s2 + $0xa8] sm:$0xff]
        %v372 = vld [vmem:[%s2 + $0xb0] sm:$0xff]
        %v373 = vld [vmem:[%s2 + $0xb8] sm:$0xff]
        %v374 = vld [vmem:[%s2 + $0xc0] sm:$0xff]
        %v375 = vld [vmem:[%s2 + $0xc8] sm:$0xff]
        %v376 = vld [vmem:[%s2 + $0xd0] sm:$0xff]
        %v377 = vld [vmem:[%s2 + $0xd8] sm:$0xff]
        %v378 = vld [vmem:[%s2 + $0xe0] sm:$0xff]
        %v379 = vld [vmem:[%s2 + $0xe8] sm:$0xff]
        %v380 = vld [vmem:[%s2 + $0xf0] sm:$0xff]
        %v381 = vld [vmem:[%s2 + $0xf8] sm:$0xff]
        %v382 = vld [vmem:[%s2 + $0x100] sm:$0xff]
        %v383 = vld [vmem:[%s2 + $0x108] sm:$0xff]
        %v384 = vld [vmem:[%s2 + $0x110] sm:$0xff]
        %v385 = vld [vmem:[%s2 + $0x118] sm:$0xff]
        %v386 = vld [vmem:[%s2 + $0x120] sm:$0xff]
        %v387 = vld [vmem:[%s2 + $0x128] sm:$0xff]
        %v388 = vld [vmem:[%s2 + $0x130] sm:$0xff]
        %v389 = vld [vmem:[%s2 + $0x138] sm:$0xff]
        %v390 = vld [vmem:[%s2 + $0x140] sm:$0xff]
        %v391 = vld [vmem:[%s2 + $0x148] sm:$0xff]
        %v392 = vld [vmem:[%s2 + $0x150] sm:$0xff]
        %v393 = vld [vmem:[%s2 + $0x158] sm:$0xff]
        %v394 = vld [vmem:[%s2 + $0x160] sm:$0xff]
        %v395 = vld [vmem:[%s2 + $0x168] sm:$0xff]
        %v396 = vld [vmem:[%s2 + $0x170] sm:$0xff]
        %v397 = vld [vmem:[%s2 + $0x178] sm:$0xff]
        %v398 = vld [vmem:[%s2 + $0x180] sm:$0xff]
        %v399 = vld [vmem:[%s2 + $0x188] sm:$0xff]
        %v400 = vld [vmem:[%s2 + $0x190] sm:$0xff]
        %v401 = vld [vmem:[%s2 + $0x198] sm:$0xff]
        %v402 = vld [vmem:[%s2 + $0x1a0] sm:$0xff]
        %v403 = vld [vmem:[%s2 + $0x1a8] sm:$0xff]
        %v404 = vld [vmem:[%s2 + $0x1b0] sm:$0xff]
        %v405 = vld [vmem:[%s2 + $0x1b8] sm:$0xff]
        %v406 = vld [vmem:[%s2 + $0x1c0] sm:$0xff]
        %v407 = vld [vmem:[%s2 + $0x1c8] sm:$0xff]
        %v408 = vld [vmem:[%s2 + $0x1d0] sm:$0xff]
        %v409 = vld [vmem:[%s2 + $0x1d8] sm:$0xff]
        %v410 = vld [vmem:[%s2 + $0x1e0] sm:$0xff]
        %v411 = vld [vmem:[%s2 + $0x1e8] sm:$0xff]
        %v412 = vld [vmem:[%s2 + $0x1f0] sm:$0xff]
        %v413 = vld [vmem:[%s2 + $0x1f8] sm:$0xff]
        %v414 = vld [vmem:[%s2 + $0x200] sm:$0xff]
        %v415 = vld [vmem:[%s2 + $0x208] sm:$0xff]
        %v416 = vld [vmem:[%s2 + $0x210] sm:$0xff]
        %v417 = vld [vmem:[%s2 + $0x218] sm:$0xff]
        %v418 = vld [vmem:[%s2 + $0x220] sm:$0xff]
        %v419 = vld [vmem:[%s2 + $0x228] sm:$0xff]
        %v420 = vld [vmem:[%s2 + $0x230] sm:$0xff]
        %v421 = vld [vmem:[%s2 + $0x238] sm:$0xff]
        %v422 = vld [vmem:[%s2 + $0x240] sm:$0xff]
        %v423 = vld [vmem:[%s2 + $0x248] sm:$0xff]
        %v424 = vld [vmem:[%s2 + $0x250] sm:$0xff]
        %v425 = vld [vmem:[%s2 + $0x258] sm:$0xff]
        %v426 = vld [vmem:[%s2 + $0x260] sm:$0xff]
        %v427 = vld [vmem:[%s2 + $0x268] sm:$0xff]
        %v428 = vld [vmem:[%s2 + $0x270] sm:$0xff]
        %v429 = vld [vmem:[%s2 + $0x278] sm:$0xff]
        %v430 = vld [vmem:[%s2 + $0x280] sm:$0xff]
        %v431 = vld [vmem:[%s2 + $0x288] sm:$0xff]
        %v432 = vld [vmem:[%s2 + $0x290] sm:$0xff]
        %v433 = vld [vmem:[%s2 + $0x298] sm:$0xff]
        %v434 = vld [vmem:[%s2 + $0x2a0] sm:$0xff]
        %v435 = vld [vmem:[%s2 + $0x2a8] sm:$0xff]
        %v436 = vld [vmem:[%s2 + $0x2b0] sm:$0xff]
        %v437 = vld [vmem:[%s2 + $0x2b8] sm:$0xff]
        %v438 = vld [vmem:[%s2 + $0x2c0] sm:$0xff]
        %v439 = vld [vmem:[%s2 + $0x2c8] sm:$0xff]
        %v440 = vld [vmem:[%s2 + $0x2d0] sm:$0xff]
        %v441 = vld [vmem:[%s2 + $0x2d8] sm:$0xff]
        %v442 = vld [vmem:[%s2 + $0x2e0] sm:$0xff]
        %v443 = vld [vmem:[%s2 + $0x2e8] sm:$0xff]
        %v444 = vld [vmem:[%s2 + $0x2f0] sm:$0xff]
        %v445 = vld [vmem:[%s2 + $0x2f8] sm:$0xff]
        %v446 = vld [vmem:[%s2 + $0x300] sm:$0xff]
        %v447 = vld [vmem:[%s2 + $0x308] sm:$0xff]
        %v448 = vld [vmem:[%s2 + $0x310] sm:$0xff]
        %v449 = vld [vmem:[%s2 + $0x318] sm:$0xff]
        %v450 = vld [vmem:[%s2 + $0x320] sm:$0xff]
        %v451 = vld [vmem:[%s2 + $0x328] sm:$0xff]
        %v452 = vld [vmem:[%s2 + $0x330] sm:$0xff]
        %v453 = vld [vmem:[%s2 + $0x338] sm:$0xff]
        %v454 = vld [vmem:[%s2 + $0x340] sm:$0xff]
        %v455 = vld [vmem:[%s2 + $0x348] sm:$0xff]
        %v456 = vld [vmem:[%s2 + $0x350] sm:$0xff]
        %v457 = vld [vmem:[%s2 + $0x358] sm:$0xff]
        %v458 = vld [vmem:[%s2 + $0x360] sm:$0xff]
        %v459 = vld [vmem:[%s2 + $0x368] sm:$0xff]
        %v460 = vld [vmem:[%s2 + $0x370] sm:$0xff]
        %v461 = vld [vmem:[%s2 + $0x378] sm:$0xff]
        %v462 = vld [vmem:[%s2 + $0x380] sm:$0xff]
        %v463 = vld [vmem:[%s2 + $0x388] sm:$0xff]
        %v464 = vld [vmem:[%s2 + $0x390] sm:$0xff]
        %v465 = vld [vmem:[%s2 + $0x398] sm:$0xff]
        %v466 = vld [vmem:[%s2 + $0x3a0] sm:$0xff]
        %v467 = vld [vmem:[%s2 + $0x3a8] sm:$0xff]
        %v468 = vld [vmem:[%s2 + $0x3b0] sm:$0xff]
        %v469 = vld [vmem:[%s2 + $0x3b8] sm:$0xff]
        %v470 = vld [vmem:[%s2 + $0x3c0] sm:$0xff]
        %v471 = vld [vmem:[%s2 + $0x3c8] sm:$0xff]
        %v472 = vld [vmem:[%s2 + $0x3d0] sm:$0xff]
        %v473 = vld [vmem:[%s2 + $0x3d8] sm:$0xff]
        %v474 = vld [vmem:[%s2 + $0x3e0] sm:$0xff]
        %v475 = vld [vmem:[%s2 + $0x3e8] sm:$0xff]
        %v476 = vld [vmem:[%s2 + $0x3f0] sm:$0xff]
        %v477 = vld [vmem:[%s2 + $0x3f8] sm:$0xff]
        %v478 = vld [vmem:[%s2 + $0x400] sm:$0xff]
        %v479 = vld [vmem:[%s2 + $0x408] sm:$0xff]
        %v480 = vld [vmem:[%s2 + $0x410] sm:$0xff]
        %v481 = vld [vmem:[%s2 + $0x418] sm:$0xff]
        %v482 = vld [vmem:[%s2 + $0x420] sm:$0xff]
        %v483 = vld [vmem:[%s2 + $0x428] sm:$0xff]
        %v484 = vld [vmem:[%s2 + $0x430] sm:$0xff]
        %v485 = vld [vmem:[%s2 + $0x438] sm:$0xff]
        %v486 = vld [vmem:[%s2 + $0x440] sm:$0xff]
        %v487 = vld [vmem:[%s2 + $0x448] sm:$0xff]
        %v488 = vld [vmem:[%s2 + $0x450] sm:$0xff]
        %v489 = vld [vmem:[%s2 + $0x458] sm:$0xff]
        %v490 = vld [vmem:[%s2 + $0x460] sm:$0xff]
        %v491 = vld [vmem:[%s2 + $0x468] sm:$0xff]
        %v492 = vld [vmem:[%s2 + $0x470] sm:$0xff]
        %v493 = vld [vmem:[%s2 + $0x478] sm:$0xff]
        %v494 = vld [vmem:[%s3] sm:$0x7]
        %v495 = vld [vmem:[#allocation2] sm:$0xff]
        %v496 = vld [vmem:[#allocation2 + $0x8] sm:$0xff]
        %v497 = vld [vmem:[#allocation2 + $0x10] sm:$0xff]
        %v498 = vld [vmem:[%s300] sm:$0x1]
        %v499 = vld [vmem:[%s300 + $0x8] sm:$0x1]
        %v500 = vld [vmem:[%s300 + $0x10] sm:$0x1]
        %v501 = vld [vmem:[%s300 + $0x18] sm:$0x1]
        %v502 = vld [vmem:[%s300 + $0x20] sm:$0x1]
        %v503 = vld [vmem:[%s300 + $0x28] sm:$0x1]
        %v504 = vld [vmem:[%s300 + $0x30] sm:$0x1]
        %v505 = vld [vmem:[%s300 + $0x38] sm:$0x1]
        %506 = vmatpush.msra.mxu0 %v395
        %507 = vmatpush.msra.mxu0 %v392
        %508 = vmatpush.msra.mxu0 %v389
        %509 = vmatpush.msra.mxu0 %v386
        %510 = vmatpush.msra.mxu0 %v383
        %511 = vmatpush.msra.mxu0 %v380
        %512 = vmatpush.msra.mxu0 %v377
        %513 = vmatpush.msra.mxu0 %v374
        %514 = vmatpush.msra.mxu0 %v371
        %515 = vmatpush.msra.mxu0 %v368
        %516 = vmatpush.msra.mxu0 %v365
        %517 = vmatpush.msra.mxu0 %v362
        %518 = vmatpush.msra.mxu0 %v359
        %519 = vmatpush.msra.mxu0 %v356
        %520 = vmatpush.msra.mxu0 %v353
        %521 = vmatpush.msra.mxu0 %v350
        %522 = vmatmul.f32.gmra.mxu0 %v495
        %v523 = vpop.f32.mrf.mxu0
        %v524 = vadd.f32 0.0, %v523
        %525 = vdwg.mxu0
        %526 = vmatpush.msra.mxu0 %v443
        %527 = vmatpush.msra.mxu0 %v440
        %528 = vmatpush.msra.mxu0 %v437
        %529 = vmatpush.msra.mxu0 %v434
        %530 = vmatpush.msra.mxu0 %v431
        %531 = vmatpush.msra.mxu0 %v428
        %532 = vmatpush.msra.mxu0 %v425
        %533 = vmatpush.msra.mxu0 %v422
        %534 = vmatpush.msra.mxu0 %v419
        %535 = vmatpush.msra.mxu0 %v416
        %536 = vmatpush.msra.mxu0 %v413
        %537 = vmatpush.msra.mxu0 %v410
        %538 = vmatpush.msra.mxu0 %v407
        %539 = vmatpush.msra.mxu0 %v404
        %540 = vmatpush.msra.mxu0 %v401
        %541 = vmatpush.msra.mxu0 %v398
        %542 = vmatmul.f32.gmra.mxu0 %v496
        %v543 = vpop.f32.mrf.mxu0
        %v544 = vadd.f32 %v524, %v543
        %545 = vdwg.mxu0
        %546 = vmatpush.msra.mxu0 %v491
        %547 = vmatpush.msra.mxu0 %v488
        %548 = vmatpush.msra.mxu0 %v485
        %549 = vmatpush.msra.mxu0 %v482
        %550 = vmatpush.msra.mxu0 %v479
        %551 = vmatpush.msra.mxu0 %v476
        %552 = vmatpush.msra.mxu0 %v473
        %553 = vmatpush.msra.mxu0 %v470
        %554 = vmatpush.msra.mxu0 %v467
        %555 = vmatpush.msra.mxu0 %v464
        %556 = vmatpush.msra.mxu0 %v461
        %557 = vmatpush.msra.mxu0 %v458
        %558 = vmatpush.msra.mxu0 %v455
        %559 = vmatpush.msra.mxu0 %v452
        %560 = vmatpush.msra.mxu0 %v449
        %561 = vmatpush.msra.mxu0 %v446
        %562 = vmatmul.f32.gmra.mxu0 %v497
        %v563 = vpop.f32.mrf.mxu0
        %v564 = vadd.f32 %v544, %v563
        %565 = vdwg.mxu0
        %566 = vmatpush.msra.mxu0 %v396
        %567 = vmatpush.msra.mxu0 %v393
        %568 = vmatpush.msra.mxu0 %v390
        %569 = vmatpush.msra.mxu0 %v387
        %570 = vmatpush.msra.mxu0 %v384
        %571 = vmatpush.msra.mxu0 %v381
        %572 = vmatpush.msra.mxu0 %v378
        %573 = vmatpush.msra.mxu0 %v375
        %574 = vmatpush.msra.mxu0 %v372
        %575 = vmatpush.msra.mxu0 %v369
        %576 = vmatpush.msra.mxu0 %v366
        %577 = vmatpush.msra.mxu0 %v363
        %578 = vmatpush.msra.mxu0 %v360
        %579 = vmatpush.msra.mxu0 %v357
        %580 = vmatpush.msra.mxu0 %v354
        %581 = vmatpush.msra.mxu0 %v351
        %582 = vmatmul.f32.gmra.mxu0 %v495
        %v583 = vpop.f32.mrf.mxu0
        %v584 = vadd.f32 0.0, %v583
        %585 = vdwg.mxu0
        %586 = vmatpush.msra.mxu0 %v444
        %587 = vmatpush.msra.mxu0 %v441
        %588 = vmatpush.msra.mxu0 %v438
        %589 = vmatpush.msra.mxu0 %v435
        %590 = vmatpush.msra.mxu0 %v432
        %591 = vmatpush.msra.mxu0 %v429
        %592 = vmatpush.msra.mxu0 %v426
        %593 = vmatpush.msra.mxu0 %v423
        %594 = vmatpush.msra.mxu0 %v420
        %595 = vmatpush.msra.mxu0 %v417
        %596 = vmatpush.msra.mxu0 %v414
        %597 = vmatpush.msra.mxu0 %v411
        %598 = vmatpush.msra.mxu0 %v408
        %599 = vmatpush.msra.mxu0 %v405
        %600 = vmatpush.msra.mxu0 %v402
        %601 = vmatpush.msra.mxu0 %v399
        %602 = vmatmul.f32.gmra.mxu0 %v496
        %v603 = vpop.f32.mrf.mxu0
        %v604 = vadd.f32 %v584, %v603
        %605 = vdwg.mxu0
        %606 = vmatpush.msra.mxu0 %v492
        %607 = vmatpush.msra.mxu0 %v489
        %608 = vmatpush.msra.mxu0 %v486
        %609 = vmatpush.msra.mxu0 %v483
        %610 = vmatpush.msra.mxu0 %v480
        %611 = vmatpush.msra.mxu0 %v477
        %612 = vmatpush.msra.mxu0 %v474
        %613 = vmatpush.msra.mxu0 %v471
        %614 = vmatpush.msra.mxu0 %v468
        %615 = vmatpush.msra.mxu0 %v465
        %616 = vmatpush.msra.mxu0 %v462
        %617 = vmatpush.msra.mxu0 %v459
        %618 = vmatpush.msra.mxu0 %v456
        %619 = vmatpush.msra.mxu0 %v453
        %620 = vmatpush.msra.mxu0 %v450
        %621 = vmatpush.msra.mxu0 %v447
        %622 = vmatmul.f32.gmra.mxu0 %v497
        %v623 = vpop.f32.mrf.mxu0
        %v624 = vadd.f32 %v604, %v623
        %625 = vdwg.mxu0
        %626 = vmatpush.msra.mxu0 %v397
        %627 = vmatpush.msra.mxu0 %v394
        %628 = vmatpush.msra.mxu0 %v391
        %629 = vmatpush.msra.mxu0 %v388
        %630 = vmatpush.msra.mxu0 %v385
        %631 = vmatpush.msra.mxu0 %v382
        %632 = vmatpush.msra.mxu0 %v379
        %633 = vmatpush.msra.mxu0 %v376
        %634 = vmatpush.msra.mxu0 %v373
        %635 = vmatpush.msra.mxu0 %v370
        %636 = vmatpush.msra.mxu0 %v367
        %637 = vmatpush.msra.mxu0 %v364
        %638 = vmatpush.msra.mxu0 %v361
        %639 = vmatpush.msra.mxu0 %v358
        %640 = vmatpush.msra.mxu0 %v355
        %641 = vmatpush.msra.mxu0 %v352
        %642 = vmatmul.f32.gmra.mxu0 %v495
        %v643 = vpop.f32.mrf.mxu0
        %v644 = vadd.f32 0.0, %v643
        %645 = vdwg.mxu0
        %646 = vmatpush.msra.mxu0 %v445
        %647 = vmatpush.msra.mxu0 %v442
        %648 = vmatpush.msra.mxu0 %v439
        %649 = vmatpush.msra.mxu0 %v436
        %650 = vmatpush.msra.mxu0 %v433
        %651 = vmatpush.msra.mxu0 %v430
        %652 = vmatpush.msra.mxu0 %v427
        %653 = vmatpush.msra.mxu0 %v424
        %654 = vmatpush.msra.mxu0 %v421
        %655 = vmatpush.msra.mxu0 %v418
        %656 = vmatpush.msra.mxu0 %v415
        %657 = vmatpush.msra.mxu0 %v412
        %658 = vmatpush.msra.mxu0 %v409
        %659 = vmatpush.msra.mxu0 %v406
        %660 = vmatpush.msra.mxu0 %v403
        %661 = vmatpush.msra.mxu0 %v400
        %662 = vmatmul.f32.gmra.mxu0 %v496
        %v663 = vpop.f32.mrf.mxu0
        %v664 = vadd.f32 %v644, %v663
        %665 = vdwg.mxu0
        %666 = vmatpush.msra.mxu0 %v493
        %667 = vmatpush.msra.mxu0 %v490
        %668 = vmatpush.msra.mxu0 %v487
        %669 = vmatpush.msra.mxu0 %v484
        %670 = vmatpush.msra.mxu0 %v481
        %671 = vmatpush.msra.mxu0 %v478
        %672 = vmatpush.msra.mxu0 %v475
        %673 = vmatpush.msra.mxu0 %v472
        %674 = vmatpush.msra.mxu0 %v469
        %675 = vmatpush.msra.mxu0 %v466
        %676 = vmatpush.msra.mxu0 %v463
        %677 = vmatpush.msra.mxu0 %v460
        %678 = vmatpush.msra.mxu0 %v457
        %679 = vmatpush.msra.mxu0 %v454
        %680 = vmatpush.msra.mxu0 %v451
        %681 = vmatpush.msra.mxu0 %v448
        %682 = vmatmul.f32.gmra.mxu0 %v497
        %v683 = vpop.f32.mrf.mxu0
        %v684 = vadd.f32 %v664, %v683
        %685 = vdwg.mxu0
        %v694 = vrot.slane %v499, 7
        %vm695 = vcmask 1041409
        %v696 = vsel %vm695, %v694, %v498
        %v697 = vrot.slane %v500, 6
        %vm698 = vcmask 1042434
        %v699 = vsel %vm698, %v697, %v696
        %v700 = vrot.slane %v501, 5
        %vm701 = vcmask 1043459
        %v702 = vsel %vm701, %v700, %v699
        %v703 = vrot.slane %v502, 4
        %vm704 = vcmask 1044484
        %v705 = vsel %vm704, %v703, %v702
        %v706 = vrot.slane %v503, 3
        %vm707 = vcmask 1045509
        %v708 = vsel %vm707, %v706, %v705
        %v709 = vrot.slane %v504, 2
        %vm710 = vcmask 1046534
        %v711 = vsel %vm710, %v709, %v708
        %v712 = vrot.slane %v505, 1
        %vm713 = vcmask 1047559
        %v714 = vsel %vm713, %v712, %v711
        %vm715 = vcmask 261120
        %v716 = vsel %vm715, %v714, 0
        %718 = vmatpush.msra.mxu0 0.0
        %719 = vmatpush.msra.mxu0 0.0
        %720 = vmatpush.msra.mxu0 0.0
        %721 = vmatpush.msra.mxu0 0.0
        %722 = vmatpush.msra.mxu0 0.0
        %723 = vmatpush.msra.mxu0 0.0
        %724 = vmatpush.msra.mxu0 0.0
        %725 = vmatpush.msra.mxu0 0.0
        %726 = vmatpush.msra.mxu0 0.0
        %727 = vmatpush.msra.mxu0 0.0
        %728 = vmatpush.msra.mxu0 0.0
        %729 = vmatpush.msra.mxu0 0.0
        %730 = vmatpush.msra.mxu0 %v347
        %731 = vmatpush.msra.mxu0 %v344
        %732 = vmatpush.msra.mxu0 %v341
        %733 = vmatpush.msra.mxu0 %v338
        %734 = vmatmul.f32.gmra.mxu0 %v716
        %v735 = vpop.f32.mrf.mxu0
        %v736 = vadd.f32 %v564, %v735
        %737 = vdwg.mxu0
        %738 = vmatpush.msra.mxu0 0.0
        %739 = vmatpush.msra.mxu0 0.0
        %740 = vmatpush.msra.mxu0 0.0
        %741 = vmatpush.msra.mxu0 0.0
        %742 = vmatpush.msra.mxu0 0.0
        %743 = vmatpush.msra.mxu0 0.0
        %744 = vmatpush.msra.mxu0 0.0
        %745 = vmatpush.msra.mxu0 0.0
        %746 = vmatpush.msra.mxu0 0.0
        %747 = vmatpush.msra.mxu0 0.0
        %748 = vmatpush.msra.mxu0 0.0
        %749 = vmatpush.msra.mxu0 0.0
        %750 = vmatpush.msra.mxu0 %v348
        %751 = vmatpush.msra.mxu0 %v345
        %752 = vmatpush.msra.mxu0 %v342
        %753 = vmatpush.msra.mxu0 %v339
        %754 = vmatmul.f32.gmra.mxu0 %v716
        %v755 = vpop.f32.mrf.mxu0
        %v756 = vadd.f32 %v624, %v755
        %757 = vdwg.mxu0
        %758 = vmatpush.msra.mxu0 0.0
        %759 = vmatpush.msra.mxu0 0.0
        %760 = vmatpush.msra.mxu0 0.0
        %761 = vmatpush.msra.mxu0 0.0
        %762 = vmatpush.msra.mxu0 0.0
        %763 = vmatpush.msra.mxu0 0.0
        %764 = vmatpush.msra.mxu0 0.0
        %765 = vmatpush.msra.mxu0 0.0
        %766 = vmatpush.msra.mxu0 0.0
        %767 = vmatpush.msra.mxu0 0.0
        %768 = vmatpush.msra.mxu0 0.0
        %769 = vmatpush.msra.mxu0 0.0
        %770 = vmatpush.msra.mxu0 %v349
        %771 = vmatpush.msra.mxu0 %v346
        %772 = vmatpush.msra.mxu0 %v343
        %773 = vmatpush.msra.mxu0 %v340
        %774 = vmatmul.f32.gmra.mxu0 %v716
        %v775 = vpop.f32.mrf.mxu0
        %v776 = vadd.f32 %v684, %v775
        %777 = vdwg.mxu0
        %v779 = vperm.slane %v494, 0
        %v780 = vperm.slane %v494, 1
        %v781 = vperm.slane %v494, 2
        %v785 = vadd.f32 %v736, %v779
        %v786 = vadd.f32 %v756, %v780
        %v787 = vadd.f32 %v776, %v781
        %v788 = vtanh.pop %v785
        %v789 = vtanh.pop %v786
        %v790 = vtanh.pop %v787
        %v791 = vld [vmem:[%s300 + $0x1] sm:$0x1]
        %v792 = vld [vmem:[%s300 + $0x9] sm:$0x1]
        %v793 = vld [vmem:[%s300 + $0x11] sm:$0x1]
        %v794 = vld [vmem:[%s300 + $0x19] sm:$0x1]
        %v795 = vld [vmem:[%s300 + $0x21] sm:$0x1]
        %v796 = vld [vmem:[%s300 + $0x29] sm:$0x1]
        %v797 = vld [vmem:[%s300 + $0x31] sm:$0x1]
        %v798 = vld [vmem:[%s300 + $0x39] sm:$0x1]
        %799 = vmatpush.msra.mxu0 %v395
        %800 = vmatpush.msra.mxu0 %v392
        %801 = vmatpush.msra.mxu0 %v389
        %802 = vmatpush.msra.mxu0 %v386
        %803 = vmatpush.msra.mxu0 %v383
        %804 = vmatpush.msra.mxu0 %v380
        %805 = vmatpush.msra.mxu0 %v377
        %806 = vmatpush.msra.mxu0 %v374
        %807 = vmatpush.msra.mxu0 %v371
        %808 = vmatpush.msra.mxu0 %v368
        %809 = vmatpush.msra.mxu0 %v365
        %810 = vmatpush.msra.mxu0 %v362
        %811 = vmatpush.msra.mxu0 %v359
        %812 = vmatpush.msra.mxu0 %v356
        %813 = vmatpush.msra.mxu0 %v353
        %814 = vmatpush.msra.mxu0 %v350
        %815 = vmatmul.f32.gmra.mxu0 %v788
        %v816 = vpop.f32.mrf.mxu0
        %v817 = vadd.f32 0.0, %v816
        %818 = vdwg.mxu0
        %819 = vmatpush.msra.mxu0 %v443
        %820 = vmatpush.msra.mxu0 %v440
        %821 = vmatpush.msra.mxu0 %v437
        %822 = vmatpush.msra.mxu0 %v434
        %823 = vmatpush.msra.mxu0 %v431
        %824 = vmatpush.msra.mxu0 %v428
        %825 = vmatpush.msra.mxu0 %v425
        %826 = vmatpush.msra.mxu0 %v422
        %827 = vmatpush.msra.mxu0 %v419
        %828 = vmatpush.msra.mxu0 %v416
        %829 = vmatpush.msra.mxu0 %v413
        %830 = vmatpush.msra.mxu0 %v410
        %831 = vmatpush.msra.mxu0 %v407
        %832 = vmatpush.msra.mxu0 %v404
        %833 = vmatpush.msra.mxu0 %v401
        %834 = vmatpush.msra.mxu0 %v398
        %835 = vmatmul.f32.gmra.mxu0 %v789
        %v836 = vpop.f32.mrf.mxu0
        %v837 = vadd.f32 %v817, %v836
        %838 = vdwg.mxu0
        %839 = vmatpush.msra.mxu0 %v491
        %840 = vmatpush.msra.mxu0 %v488
        %841 = vmatpush.msra.mxu0 %v485
        %842 = vmatpush.msra.mxu0 %v482
        %843 = vmatpush.msra.mxu0 %v479
        %844 = vmatpush.msra.mxu0 %v476
        %845 = vmatpush.msra.mxu0 %v473
        %846 = vmatpush.msra.mxu0 %v470
        %847 = vmatpush.msra.mxu0 %v467
        %848 = vmatpush.msra.mxu0 %v464
        %849 = vmatpush.msra.mxu0 %v461
        %850 = vmatpush.msra.mxu0 %v458
        %851 = vmatpush.msra.mxu0 %v455
        %852 = vmatpush.msra.mxu0 %v452
        %853 = vmatpush.msra.mxu0 %v449
        %854 = vmatpush.msra.mxu0 %v446
        %855 = vmatmul.f32.gmra.mxu0 %v790
        %v856 = vpop.f32.mrf.mxu0
        %v857 = vadd.f32 %v837, %v856
        %858 = vdwg.mxu0
        %859 = vmatpush.msra.mxu0 %v396
        %860 = vmatpush.msra.mxu0 %v393
        %861 = vmatpush.msra.mxu0 %v390
        %862 = vmatpush.msra.mxu0 %v387
        %863 = vmatpush.msra.mxu0 %v384
        %864 = vmatpush.msra.mxu0 %v381
        %865 = vmatpush.msra.mxu0 %v378
        %866 = vmatpush.msra.mxu0 %v375
        %867 = vmatpush.msra.mxu0 %v372
        %868 = vmatpush.msra.mxu0 %v369
        %869 = vmatpush.msra.mxu0 %v366
        %870 = vmatpush.msra.mxu0 %v363
        %871 = vmatpush.msra.mxu0 %v360
        %872 = vmatpush.msra.mxu0 %v357
        %873 = vmatpush.msra.mxu0 %v354
        %874 = vmatpush.msra.mxu0 %v351
        %875 = vmatmul.f32.gmra.mxu0 %v788
        %v876 = vpop.f32.mrf.mxu0
        %v877 = vadd.f32 0.0, %v876
        %878 = vdwg.mxu0
        %879 = vmatpush.msra.mxu0 %v444
        %880 = vmatpush.msra.mxu0 %v441
        %881 = vmatpush.msra.mxu0 %v438
        %882 = vmatpush.msra.mxu0 %v435
        %883 = vmatpush.msra.mxu0 %v432
        %884 = vmatpush.msra.mxu0 %v429
        %885 = vmatpush.msra.mxu0 %v426
        %886 = vmatpush.msra.mxu0 %v423
        %887 = vmatpush.msra.mxu0 %v420
        %888 = vmatpush.msra.mxu0 %v417
        %889 = vmatpush.msra.mxu0 %v414
        %890 = vmatpush.msra.mxu0 %v411
        %891 = vmatpush.msra.mxu0 %v408
        %892 = vmatpush.msra.mxu0 %v405
        %893 = vmatpush.msra.mxu0 %v402
        %894 = vmatpush.msra.mxu0 %v399
        %895 = vmatmul.f32.gmra.mxu0 %v789
        %v896 = vpop.f32.mrf.mxu0
        %v897 = vadd.f32 %v877, %v896
        %898 = vdwg.mxu0
        %899 = vmatpush.msra.mxu0 %v492
        %900 = vmatpush.msra.mxu0 %v489
        %901 = vmatpush.msra.mxu0 %v486
        %902 = vmatpush.msra.mxu0 %v483
        %903 = vmatpush.msra.mxu0 %v480
        %904 = vmatpush.msra.mxu0 %v477
        %905 = vmatpush.msra.mxu0 %v474
        %906 = vmatpush.msra.mxu0 %v471
        %907 = vmatpush.msra.mxu0 %v468
        %908 = vmatpush.msra.mxu0 %v465
        %909 = vmatpush.msra.mxu0 %v462
        %910 = vmatpush.msra.mxu0 %v459
        %911 = vmatpush.msra.mxu0 %v456
        %912 = vmatpush.msra.mxu0 %v453
        %913 = vmatpush.msra.mxu0 %v450
        %914 = vmatpush.msra.mxu0 %v447
        %915 = vmatmul.f32.gmra.mxu0 %v790
        %v916 = vpop.f32.mrf.mxu0
        %v917 = vadd.f32 %v897, %v916
        %918 = vdwg.mxu0
        %919 = vmatpush.msra.mxu0 %v397
        %920 = vmatpush.msra.mxu0 %v394
        %921 = vmatpush.msra.mxu0 %v391
        %922 = vmatpush.msra.mxu0 %v388
        %923 = vmatpush.msra.mxu0 %v385
        %924 = vmatpush.msra.mxu0 %v382
        %925 = vmatpush.msra.mxu0 %v379
        %926 = vmatpush.msra.mxu0 %v376
        %927 = vmatpush.msra.mxu0 %v373
        %928 = vmatpush.msra.mxu0 %v370
        %929 = vmatpush.msra.mxu0 %v367
        %930 = vmatpush.msra.mxu0 %v364
        %931 = vmatpush.msra.mxu0 %v361
        %932 = vmatpush.msra.mxu0 %v358
        %933 = vmatpush.msra.mxu0 %v355
        %934 = vmatpush.msra.mxu0 %v352
        %935 = vmatmul.f32.gmra.mxu0 %v788
        %v936 = vpop.f32.mrf.mxu0
        %v937 = vadd.f32 0.0, %v936
        %938 = vdwg.mxu0
        %939 = vmatpush.msra.mxu0 %v445
        %940 = vmatpush.msra.mxu0 %v442
        %941 = vmatpush.msra.mxu0 %v439
        %942 = vmatpush.msra.mxu0 %v436
        %943 = vmatpush.msra.mxu0 %v433
        %944 = vmatpush.msra.mxu0 %v430
        %945 = vmatpush.msra.mxu0 %v427
        %946 = vmatpush.msra.mxu0 %v424
        %947 = vmatpush.msra.mxu0 %v421
        %948 = vmatpush.msra.mxu0 %v418
        %949 = vmatpush.msra.mxu0 %v415
        %950 = vmatpush.msra.mxu0 %v412
        %951 = vmatpush.msra.mxu0 %v409
        %952 = vmatpush.msra.mxu0 %v406
        %953 = vmatpush.msra.mxu0 %v403
        %954 = vmatpush.msra.mxu0 %v400
        %955 = vmatmul.f32.gmra.mxu0 %v789
        %v956 = vpop.f32.mrf.mxu0
        %v957 = vadd.f32 %v937, %v956
        %958 = vdwg.mxu0
        %959 = vmatpush.msra.mxu0 %v493
        %960 = vmatpush.msra.mxu0 %v490
        %961 = vmatpush.msra.mxu0 %v487
        %962 = vmatpush.msra.mxu0 %v484
        %963 = vmatpush.msra.mxu0 %v481
        %964 = vmatpush.msra.mxu0 %v478
        %965 = vmatpush.msra.mxu0 %v475
        %966 = vmatpush.msra.mxu0 %v472
        %967 = vmatpush.msra.mxu0 %v469
        %968 = vmatpush.msra.mxu0 %v466
        %969 = vmatpush.msra.mxu0 %v463
        %970 = vmatpush.msra.mxu0 %v460
        %971 = vmatpush.msra.mxu0 %v457
        %972 = vmatpush.msra.mxu0 %v454
        %973 = vmatpush.msra.mxu0 %v451
        %974 = vmatpush.msra.mxu0 %v448
        %975 = vmatmul.f32.gmra.mxu0 %v790
        %v976 = vpop.f32.mrf.mxu0
        %v977 = vadd.f32 %v957, %v976
        %978 = vdwg.mxu0
        %v987 = vrot.slane %v792, 7
        %v988 = vsel %vm695, %v987, %v791
        %v989 = vrot.slane %v793, 6
        %v990 = vsel %vm698, %v989, %v988
        %v991 = vrot.slane %v794, 5
        %v992 = vsel %vm701, %v991, %v990
        %v993 = vrot.slane %v795, 4
        %v994 = vsel %vm704, %v993, %v992
        %v995 = vrot.slane %v796, 3
        %v996 = vsel %vm707, %v995, %v994
        %v997 = vrot.slane %v797, 2
        %v998 = vsel %vm710, %v997, %v996
        %v999 = vrot.slane %v798, 1
        %v1000 = vsel %vm713, %v999, %v998
        %v1001 = vsel %vm715, %v1000, 0
        %1003 = vmatpush.msra.mxu0 0.0
        %1004 = vmatpush.msra.mxu0 0.0
        %1005 = vmatpush.msra.mxu0 0.0
        %1006 = vmatpush.msra.mxu0 0.0
        %1007 = vmatpush.msra.mxu0 0.0
        %1008 = vmatpush.msra.mxu0 0.0
        %1009 = vmatpush.msra.mxu0 0.0
        %1010 = vmatpush.msra.mxu0 0.0
        %1011 = vmatpush.msra.mxu0 0.0
        %1012 = vmatpush.msra.mxu0 0.0
        %1013 = vmatpush.msra.mxu0 0.0
        %1014 = vmatpush.msra.mxu0 0.0
        %1015 = vmatpush.msra.mxu0 %v347
        %1016 = vmatpush.msra.mxu0 %v344
        %1017 = vmatpush.msra.mxu0 %v341
        %1018 = vmatpush.msra.mxu0 %v338
        %1019 = vmatmul.f32.gmra.mxu0 %v1001
        %v1020 = vpop.f32.mrf.mxu0
        %v1021 = vadd.f32 %v857, %v1020
        %1022 = vdwg.mxu0
        %1023 = vmatpush.msra.mxu0 0.0
        %1024 = vmatpush.msra.mxu0 0.0
        %1025 = vmatpush.msra.mxu0 0.0
        %1026 = vmatpush.msra.mxu0 0.0
        %1027 = vmatpush.msra.mxu0 0.0
        %1028 = vmatpush.msra.mxu0 0.0
        %1029 = vmatpush.msra.mxu0 0.0
        %1030 = vmatpush.msra.mxu0 0.0
        %1031 = vmatpush.msra.mxu0 0.0
        %1032 = vmatpush.msra.mxu0 0.0
        %1033 = vmatpush.msra.mxu0 0.0
        %1034 = vmatpush.msra.mxu0 0.0
        %1035 = vmatpush.msra.mxu0 %v348
        %1036 = vmatpush.msra.mxu0 %v345
        %1037 = vmatpush.msra.mxu0 %v342
        %1038 = vmatpush.msra.mxu0 %v339
        %1039 = vmatmul.f32.gmra.mxu0 %v1001
        %v1040 = vpop.f32.mrf.mxu0
        %v1041 = vadd.f32 %v917, %v1040
        %1042 = vdwg.mxu0
        %1043 = vmatpush.msra.mxu0 0.0
        %1044 = vmatpush.msra.mxu0 0.0
        %1045 = vmatpush.msra.mxu0 0.0
        %1046 = vmatpush.msra.mxu0 0.0
        %1047 = vmatpush.msra.mxu0 0.0
        %1048 = vmatpush.msra.mxu0 0.0
        %1049 = vmatpush.msra.mxu0 0.0
        %1050 = vmatpush.msra.mxu0 0.0
        %1051 = vmatpush.msra.mxu0 0.0
        %1052 = vmatpush.msra.mxu0 0.0
        %1053 = vmatpush.msra.mxu0 0.0
        %1054 = vmatpush.msra.mxu0 0.0
        %1055 = vmatpush.msra.mxu0 %v349
        %1056 = vmatpush.msra.mxu0 %v346
        %1057 = vmatpush.msra.mxu0 %v343
        %1058 = vmatpush.msra.mxu0 %v340
        %1059 = vmatmul.f32.gmra.mxu0 %v1001
        %v1060 = vpop.f32.mrf.mxu0
        %v1061 = vadd.f32 %v977, %v1060
        %1062 = vdwg.mxu0
        %v1063 = vadd.f32 %v1021, %v779
        %v1064 = vadd.f32 %v1041, %v780
        %v1065 = vadd.f32 %v1061, %v781
        %v1066 = vtanh.pop %v1063
        %v1067 = vtanh.pop %v1064
        %v1068 = vtanh.pop %v1065
        %v1069 = vld [vmem:[%s300 + $0x2] sm:$0x1]
        %v1070 = vld [vmem:[%s300 + $0xa] sm:$0x1]
        %v1071 = vld [vmem:[%s300 + $0x12] sm:$0x1]
        %v1072 = vld [vmem:[%s300 + $0x1a] sm:$0x1]
        %v1073 = vld [vmem:[%s300 + $0x22] sm:$0x1]
        %v1074 = vld [vmem:[%s300 + $0x2a] sm:$0x1]
        %v1075 = vld [vmem:[%s300 + $0x32] sm:$0x1]
        %v1076 = vld [vmem:[%s300 + $0x3a] sm:$0x1]
        %1077 = vmatpush.msra.mxu0 %v395
        %1078 = vmatpush.msra.mxu0 %v392
        %1079 = vmatpush.msra.mxu0 %v389
        %1080 = vmatpush.msra.mxu0 %v386
        %1081 = vmatpush.msra.mxu0 %v383
        %1082 = vmatpush.msra.mxu0 %v380
        %1083 = vmatpush.msra.mxu0 %v377
        %1084 = vmatpush.msra.mxu0 %v374
        %1085 = vmatpush.msra.mxu0 %v371
        %1086 = vmatpush.msra.mxu0 %v368
        %1087 = vmatpush.msra.mxu0 %v365
        %1088 = vmatpush.msra.mxu0 %v362
        %1089 = vmatpush.msra.mxu0 %v359
        %1090 = vmatpush.msra.mxu0 %v356
        %1091 = vmatpush.msra.mxu0 %v353
        %1092 = vmatpush.msra.mxu0 %v350
        %1093 = vmatmul.f32.gmra.mxu0 %v1066
        %v1094 = vpop.f32.mrf.mxu0
        %v1095 = vadd.f32 0.0, %v1094
        %1096 = vdwg.mxu0
        %1097 = vmatpush.msra.mxu0 %v443
        %1098 = vmatpush.msra.mxu0 %v440
        %1099 = vmatpush.msra.mxu0 %v437
        %1100 = vmatpush.msra.mxu0 %v434
        %1101 = vmatpush.msra.mxu0 %v431
        %1102 = vmatpush.msra.mxu0 %v428
        %1103 = vmatpush.msra.mxu0 %v425
        %1104 = vmatpush.msra.mxu0 %v422
        %1105 = vmatpush.msra.mxu0 %v419
        %1106 = vmatpush.msra.mxu0 %v416
        %1107 = vmatpush.msra.mxu0 %v413
        %1108 = vmatpush.msra.mxu0 %v410
        %1109 = vmatpush.msra.mxu0 %v407
        %1110 = vmatpush.msra.mxu0 %v404
        %1111 = vmatpush.msra.mxu0 %v401
        %1112 = vmatpush.msra.mxu0 %v398
        %1113 = vmatmul.f32.gmra.mxu0 %v1067
        %v1114 = vpop.f32.mrf.mxu0
        %v1115 = vadd.f32 %v1095, %v1114
        %1116 = vdwg.mxu0
        %1117 = vmatpush.msra.mxu0 %v491
        %1118 = vmatpush.msra.mxu0 %v488
        %1119 = vmatpush.msra.mxu0 %v485
        %1120 = vmatpush.msra.mxu0 %v482
        %1121 = vmatpush.msra.mxu0 %v479
        %1122 = vmatpush.msra.mxu0 %v476
        %1123 = vmatpush.msra.mxu0 %v473
        %1124 = vmatpush.msra.mxu0 %v470
        %1125 = vmatpush.msra.mxu0 %v467
        %1126 = vmatpush.msra.mxu0 %v464
        %1127 = vmatpush.msra.mxu0 %v461
        %1128 = vmatpush.msra.mxu0 %v458
        %1129 = vmatpush.msra.mxu0 %v455
        %1130 = vmatpush.msra.mxu0 %v452
        %1131 = vmatpush.msra.mxu0 %v449
        %1132 = vmatpush.msra.mxu0 %v446
        %1133 = vmatmul.f32.gmra.mxu0 %v1068
        %v1134 = vpop.f32.mrf.mxu0
        %v1135 = vadd.f32 %v1115, %v1134
        %1136 = vdwg.mxu0
        %1137 = vmatpush.msra.mxu0 %v396
        %1138 = vmatpush.msra.mxu0 %v393
        %1139 = vmatpush.msra.mxu0 %v390
        %1140 = vmatpush.msra.mxu0 %v387
        %1141 = vmatpush.msra.mxu0 %v384
        %1142 = vmatpush.msra.mxu0 %v381
        %1143 = vmatpush.msra.mxu0 %v378
        %1144 = vmatpush.msra.mxu0 %v375
        %1145 = vmatpush.msra.mxu0 %v372
        %1146 = vmatpush.msra.mxu0 %v369
        %1147 = vmatpush.msra.mxu0 %v366
        %1148 = vmatpush.msra.mxu0 %v363
        %1149 = vmatpush.msra.mxu0 %v360
        %1150 = vmatpush.msra.mxu0 %v357
        %1151 = vmatpush.msra.mxu0 %v354
        %1152 = vmatpush.msra.mxu0 %v351
        %1153 = vmatmul.f32.gmra.mxu0 %v1066
        %v1154 = vpop.f32.mrf.mxu0
        %v1155 = vadd.f32 0.0, %v1154
        %1156 = vdwg.mxu0
        %1157 = vmatpush.msra.mxu0 %v444
        %1158 = vmatpush.msra.mxu0 %v441
        %1159 = vmatpush.msra.mxu0 %v438
        %1160 = vmatpush.msra.mxu0 %v435
        %1161 = vmatpush.msra.mxu0 %v432
        %1162 = vmatpush.msra.mxu0 %v429
        %1163 = vmatpush.msra.mxu0 %v426
        %1164 = vmatpush.msra.mxu0 %v423
        %1165 = vmatpush.msra.mxu0 %v420
        %1166 = vmatpush.msra.mxu0 %v417
        %1167 = vmatpush.msra.mxu0 %v414
        %1168 = vmatpush.msra.mxu0 %v411
        %1169 = vmatpush.msra.mxu0 %v408
        %1170 = vmatpush.msra.mxu0 %v405
        %1171 = vmatpush.msra.mxu0 %v402
        %1172 = vmatpush.msra.mxu0 %v399
        %1173 = vmatmul.f32.gmra.mxu0 %v1067
        %v1174 = vpop.f32.mrf.mxu0
        %v1175 = vadd.f32 %v1155, %v1174
        %1176 = vdwg.mxu0
        %1177 = vmatpush.msra.mxu0 %v492
        %1178 = vmatpush.msra.mxu0 %v489
        %1179 = vmatpush.msra.mxu0 %v486
        %1180 = vmatpush.msra.mxu0 %v483
        %1181 = vmatpush.msra.mxu0 %v480
        %1182 = vmatpush.msra.mxu0 %v477
        %1183 = vmatpush.msra.mxu0 %v474
        %1184 = vmatpush.msra.mxu0 %v471
        %1185 = vmatpush.msra.mxu0 %v468
        %1186 = vmatpush.msra.mxu0 %v465
        %1187 = vmatpush.msra.mxu0 %v462
        %1188 = vmatpush.msra.mxu0 %v459
        %1189 = vmatpush.msra.mxu0 %v456
        %1190 = vmatpush.msra.mxu0 %v453
        %1191 = vmatpush.msra.mxu0 %v450
        %1192 = vmatpush.msra.mxu0 %v447
        %1193 = vmatmul.f32.gmra.mxu0 %v1068
        %v1194 = vpop.f32.mrf.mxu0
        %v1195 = vadd.f32 %v1175, %v1194
        %1196 = vdwg.mxu0
        %1197 = vmatpush.msra.mxu0 %v397
        %1198 = vmatpush.msra.mxu0 %v394
        %1199 = vmatpush.msra.mxu0 %v391
        %1200 = vmatpush.msra.mxu0 %v388
        %1201 = vmatpush.msra.mxu0 %v385
        %1202 = vmatpush.msra.mxu0 %v382
        %1203 = vmatpush.msra.mxu0 %v379
        %1204 = vmatpush.msra.mxu0 %v376
        %1205 = vmatpush.msra.mxu0 %v373
        %1206 = vmatpush.msra.mxu0 %v370
        %1207 = vmatpush.msra.mxu0 %v367
        %1208 = vmatpush.msra.mxu0 %v364
        %1209 = vmatpush.msra.mxu0 %v361
        %1210 = vmatpush.msra.mxu0 %v358
        %1211 = vmatpush.msra.mxu0 %v355
        %1212 = vmatpush.msra.mxu0 %v352
        %1213 = vmatmul.f32.gmra.mxu0 %v1066
        %v1214 = vpop.f32.mrf.mxu0
        %v1215 = vadd.f32 0.0, %v1214
        %1216 = vdwg.mxu0
        %1217 = vmatpush.msra.mxu0 %v445
        %1218 = vmatpush.msra.mxu0 %v442
        %1219 = vmatpush.msra.mxu0 %v439
        %1220 = vmatpush.msra.mxu0 %v436
        %1221 = vmatpush.msra.mxu0 %v433
        %1222 = vmatpush.msra.mxu0 %v430
        %1223 = vmatpush.msra.mxu0 %v427
        %1224 = vmatpush.msra.mxu0 %v424
        %1225 = vmatpush.msra.mxu0 %v421
        %1226 = vmatpush.msra.mxu0 %v418
        %1227 = vmatpush.msra.mxu0 %v415
        %1228 = vmatpush.msra.mxu0 %v412
        %1229 = vmatpush.msra.mxu0 %v409
        %1230 = vmatpush.msra.mxu0 %v406
        %1231 = vmatpush.msra.mxu0 %v403
        %1232 = vmatpush.msra.mxu0 %v400
        %1233 = vmatmul.f32.gmra.mxu0 %v1067
        %v1234 = vpop.f32.mrf.mxu0
        %v1235 = vadd.f32 %v1215, %v1234
        %1236 = vdwg.mxu0
        %1237 = vmatpush.msra.mxu0 %v493
        %1238 = vmatpush.msra.mxu0 %v490
        %1239 = vmatpush.msra.mxu0 %v487
        %1240 = vmatpush.msra.mxu0 %v484
        %1241 = vmatpush.msra.mxu0 %v481
        %1242 = vmatpush.msra.mxu0 %v478
        %1243 = vmatpush.msra.mxu0 %v475
        %1244 = vmatpush.msra.mxu0 %v472
        %1245 = vmatpush.msra.mxu0 %v469
        %1246 = vmatpush.msra.mxu0 %v466
        %1247 = vmatpush.msra.mxu0 %v463
        %1248 = vmatpush.msra.mxu0 %v460
        %1249 = vmatpush.msra.mxu0 %v457
        %1250 = vmatpush.msra.mxu0 %v454
        %1251 = vmatpush.msra.mxu0 %v451
        %1252 = vmatpush.msra.mxu0 %v448
        %1253 = vmatmul.f32.gmra.mxu0 %v1068
        %v1254 = vpop.f32.mrf.mxu0
        %v1255 = vadd.f32 %v1235, %v1254
        %1256 = vdwg.mxu0
        %v1265 = vrot.slane %v1070, 7
        %v1266 = vsel %vm695, %v1265, %v1069
        %v1267 = vrot.slane %v1071, 6
        %v1268 = vsel %vm698, %v1267, %v1266
        %v1269 = vrot.slane %v1072, 5
        %v1270 = vsel %vm701, %v1269, %v1268
        %v1271 = vrot.slane %v1073, 4
        %v1272 = vsel %vm704, %v1271, %v1270
        %v1273 = vrot.slane %v1074, 3
        %v1274 = vsel %vm707, %v1273, %v1272
        %v1275 = vrot.slane %v1075, 2
        %v1276 = vsel %vm710, %v1275, %v1274
        %v1277 = vrot.slane %v1076, 1
        %v1278 = vsel %vm713, %v1277, %v1276
        %v1279 = vsel %vm715, %v1278, 0
        %1281 = vmatpush.msra.mxu0 0.0
        %1282 = vmatpush.msra.mxu0 0.0
        %1283 = vmatpush.msra.mxu0 0.0
        %1284 = vmatpush.msra.mxu0 0.0
        %1285 = vmatpush.msra.mxu0 0.0
        %1286 = vmatpush.msra.mxu0 0.0
        %1287 = vmatpush.msra.mxu0 0.0
        %1288 = vmatpush.msra.mxu0 0.0
        %1289 = vmatpush.msra.mxu0 0.0
        %1290 = vmatpush.msra.mxu0 0.0
        %1291 = vmatpush.msra.mxu0 0.0
        %1292 = vmatpush.msra.mxu0 0.0
        %1293 = vmatpush.msra.mxu0 %v347
        %1294 = vmatpush.msra.mxu0 %v344
        %1295 = vmatpush.msra.mxu0 %v341
        %1296 = vmatpush.msra.mxu0 %v338
        %1297 = vmatmul.f32.gmra.mxu0 %v1279
        %v1298 = vpop.f32.mrf.mxu0
        %v1299 = vadd.f32 %v1135, %v1298
        %1300 = vdwg.mxu0
        %1301 = vmatpush.msra.mxu0 0.0
        %1302 = vmatpush.msra.mxu0 0.0
        %1303 = vmatpush.msra.mxu0 0.0
        %1304 = vmatpush.msra.mxu0 0.0
        %1305 = vmatpush.msra.mxu0 0.0
        %1306 = vmatpush.msra.mxu0 0.0
        %1307 = vmatpush.msra.mxu0 0.0
        %1308 = vmatpush.msra.mxu0 0.0
        %1309 = vmatpush.msra.mxu0 0.0
        %1310 = vmatpush.msra.mxu0 0.0
        %1311 = vmatpush.msra.mxu0 0.0
        %1312 = vmatpush.msra.mxu0 0.0
        %1313 = vmatpush.msra.mxu0 %v348
        %1314 = vmatpush.msra.mxu0 %v345
        %1315 = vmatpush.msra.mxu0 %v342
        %1316 = vmatpush.msra.mxu0 %v339
        %1317 = vmatmul.f32.gmra.mxu0 %v1279
        %v1318 = vpop.f32.mrf.mxu0
        %v1319 = vadd.f32 %v1195, %v1318
        %1320 = vdwg.mxu0
        %1321 = vmatpush.msra.mxu0 0.0
        %1322 = vmatpush.msra.mxu0 0.0
        %1323 = vmatpush.msra.mxu0 0.0
        %1324 = vmatpush.msra.mxu0 0.0
        %1325 = vmatpush.msra.mxu0 0.0
        %1326 = vmatpush.msra.mxu0 0.0
        %1327 = vmatpush.msra.mxu0 0.0
        %1328 = vmatpush.msra.mxu0 0.0
        %1329 = vmatpush.msra.mxu0 0.0
        %1330 = vmatpush.msra.mxu0 0.0
        %1331 = vmatpush.msra.mxu0 0.0
        %1332 = vmatpush.msra.mxu0 0.0
        %1333 = vmatpush.msra.mxu0 %v349
        %1334 = vmatpush.msra.mxu0 %v346
        %1335 = vmatpush.msra.mxu0 %v343
        %1336 = vmatpush.msra.mxu0 %v340
        %1337 = vmatmul.f32.gmra.mxu0 %v1279
        %v1338 = vpop.f32.mrf.mxu0
        %v1339 = vadd.f32 %v1255, %v1338
        %1340 = vdwg.mxu0
        %v1341 = vadd.f32 %v1299, %v779
        %v1342 = vadd.f32 %v1319, %v780
        %v1343 = vadd.f32 %v1339, %v781
        %v1344 = vtanh.pop %v1341
        %v1345 = vtanh.pop %v1342
        %v1346 = vtanh.pop %v1343
        %v1347 = vld [vmem:[%s300 + $0x3] sm:$0x1]
        %v1348 = vld [vmem:[%s300 + $0xb] sm:$0x1]
        %v1349 = vld [vmem:[%s300 + $0x13] sm:$0x1]
        %v1350 = vld [vmem:[%s300 + $0x1b] sm:$0x1]
        %v1351 = vld [vmem:[%s300 + $0x23] sm:$0x1]
        %v1352 = vld [vmem:[%s300 + $0x2b] sm:$0x1]
        %v1353 = vld [vmem:[%s300 + $0x33] sm:$0x1]
        %v1354 = vld [vmem:[%s300 + $0x3b] sm:$0x1]
        %1355 = vmatpush.msra.mxu0 %v395
        %1356 = vmatpush.msra.mxu0 %v392
        %1357 = vmatpush.msra.mxu0 %v389
        %1358 = vmatpush.msra.mxu0 %v386
        %1359 = vmatpush.msra.mxu0 %v383
        %1360 = vmatpush.msra.mxu0 %v380
        %1361 = vmatpush.msra.mxu0 %v377
        %1362 = vmatpush.msra.mxu0 %v374
        %1363 = vmatpush.msra.mxu0 %v371
        %1364 = vmatpush.msra.mxu0 %v368
        %1365 = vmatpush.msra.mxu0 %v365
        %1366 = vmatpush.msra.mxu0 %v362
        %1367 = vmatpush.msra.mxu0 %v359
        %1368 = vmatpush.msra.mxu0 %v356
        %1369 = vmatpush.msra.mxu0 %v353
        %1370 = vmatpush.msra.mxu0 %v350
        %1371 = vmatmul.f32.gmra.mxu0 %v1344
        %v1372 = vpop.f32.mrf.mxu0
        %v1373 = vadd.f32 0.0, %v1372
        %1374 = vdwg.mxu0
        %1375 = vmatpush.msra.mxu0 %v443
        %1376 = vmatpush.msra.mxu0 %v440
        %1377 = vmatpush.msra.mxu0 %v437
        %1378 = vmatpush.msra.mxu0 %v434
        %1379 = vmatpush.msra.mxu0 %v431
        %1380 = vmatpush.msra.mxu0 %v428
        %1381 = vmatpush.msra.mxu0 %v425
        %1382 = vmatpush.msra.mxu0 %v422
        %1383 = vmatpush.msra.mxu0 %v419
        %1384 = vmatpush.msra.mxu0 %v416
        %1385 = vmatpush.msra.mxu0 %v413
        %1386 = vmatpush.msra.mxu0 %v410
        %1387 = vmatpush.msra.mxu0 %v407
        %1388 = vmatpush.msra.mxu0 %v404
        %1389 = vmatpush.msra.mxu0 %v401
        %1390 = vmatpush.msra.mxu0 %v398
        %1391 = vmatmul.f32.gmra.mxu0 %v1345
        %v1392 = vpop.f32.mrf.mxu0
        %v1393 = vadd.f32 %v1373, %v1392
        %1394 = vdwg.mxu0
        %1395 = vmatpush.msra.mxu0 %v491
        %1396 = vmatpush.msra.mxu0 %v488
        %1397 = vmatpush.msra.mxu0 %v485
        %1398 = vmatpush.msra.mxu0 %v482
        %1399 = vmatpush.msra.mxu0 %v479
        %1400 = vmatpush.msra.mxu0 %v476
        %1401 = vmatpush.msra.mxu0 %v473
        %1402 = vmatpush.msra.mxu0 %v470
        %1403 = vmatpush.msra.mxu0 %v467
        %1404 = vmatpush.msra.mxu0 %v464
        %1405 = vmatpush.msra.mxu0 %v461
        %1406 = vmatpush.msra.mxu0 %v458
        %1407 = vmatpush.msra.mxu0 %v455
        %1408 = vmatpush.msra.mxu0 %v452
        %1409 = vmatpush.msra.mxu0 %v449
        %1410 = vmatpush.msra.mxu0 %v446
        %1411 = vmatmul.f32.gmra.mxu0 %v1346
        %v1412 = vpop.f32.mrf.mxu0
        %v1413 = vadd.f32 %v1393, %v1412
        %1414 = vdwg.mxu0
        %1415 = vmatpush.msra.mxu0 %v396
        %1416 = vmatpush.msra.mxu0 %v393
        %1417 = vmatpush.msra.mxu0 %v390
        %1418 = vmatpush.msra.mxu0 %v387
        %1419 = vmatpush.msra.mxu0 %v384
        %1420 = vmatpush.msra.mxu0 %v381
        %1421 = vmatpush.msra.mxu0 %v378
        %1422 = vmatpush.msra.mxu0 %v375
        %1423 = vmatpush.msra.mxu0 %v372
        %1424 = vmatpush.msra.mxu0 %v369
        %1425 = vmatpush.msra.mxu0 %v366
        %1426 = vmatpush.msra.mxu0 %v363
        %1427 = vmatpush.msra.mxu0 %v360
        %1428 = vmatpush.msra.mxu0 %v357
        %1429 = vmatpush.msra.mxu0 %v354
        %1430 = vmatpush.msra.mxu0 %v351
        %1431 = vmatmul.f32.gmra.mxu0 %v1344
        %v1432 = vpop.f32.mrf.mxu0
        %v1433 = vadd.f32 0.0, %v1432
        %1434 = vdwg.mxu0
        %1435 = vmatpush.msra.mxu0 %v444
        %1436 = vmatpush.msra.mxu0 %v441
        %1437 = vmatpush.msra.mxu0 %v438
        %1438 = vmatpush.msra.mxu0 %v435
        %1439 = vmatpush.msra.mxu0 %v432
        %1440 = vmatpush.msra.mxu0 %v429
        %1441 = vmatpush.msra.mxu0 %v426
        %1442 = vmatpush.msra.mxu0 %v423
        %1443 = vmatpush.msra.mxu0 %v420
        %1444 = vmatpush.msra.mxu0 %v417
        %1445 = vmatpush.msra.mxu0 %v414
        %1446 = vmatpush.msra.mxu0 %v411
        %1447 = vmatpush.msra.mxu0 %v408
        %1448 = vmatpush.msra.mxu0 %v405
        %1449 = vmatpush.msra.mxu0 %v402
        %1450 = vmatpush.msra.mxu0 %v399
        %1451 = vmatmul.f32.gmra.mxu0 %v1345
        %v1452 = vpop.f32.mrf.mxu0
        %v1453 = vadd.f32 %v1433, %v1452
        %1454 = vdwg.mxu0
        %1455 = vmatpush.msra.mxu0 %v492
        %1456 = vmatpush.msra.mxu0 %v489
        %1457 = vmatpush.msra.mxu0 %v486
        %1458 = vmatpush.msra.mxu0 %v483
        %1459 = vmatpush.msra.mxu0 %v480
        %1460 = vmatpush.msra.mxu0 %v477
        %1461 = vmatpush.msra.mxu0 %v474
        %1462 = vmatpush.msra.mxu0 %v471
        %1463 = vmatpush.msra.mxu0 %v468
        %1464 = vmatpush.msra.mxu0 %v465
        %1465 = vmatpush.msra.mxu0 %v462
        %1466 = vmatpush.msra.mxu0 %v459
        %1467 = vmatpush.msra.mxu0 %v456
        %1468 = vmatpush.msra.mxu0 %v453
        %1469 = vmatpush.msra.mxu0 %v450
        %1470 = vmatpush.msra.mxu0 %v447
        %1471 = vmatmul.f32.gmra.mxu0 %v1346
        %v1472 = vpop.f32.mrf.mxu0
        %v1473 = vadd.f32 %v1453, %v1472
        %1474 = vdwg.mxu0
        %1475 = vmatpush.msra.mxu0 %v397
        %1476 = vmatpush.msra.mxu0 %v394
        %1477 = vmatpush.msra.mxu0 %v391
        %1478 = vmatpush.msra.mxu0 %v388
        %1479 = vmatpush.msra.mxu0 %v385
        %1480 = vmatpush.msra.mxu0 %v382
        %1481 = vmatpush.msra.mxu0 %v379
        %1482 = vmatpush.msra.mxu0 %v376
        %1483 = vmatpush.msra.mxu0 %v373
        %1484 = vmatpush.msra.mxu0 %v370
        %1485 = vmatpush.msra.mxu0 %v367
        %1486 = vmatpush.msra.mxu0 %v364
        %1487 = vmatpush.msra.mxu0 %v361
        %1488 = vmatpush.msra.mxu0 %v358
        %1489 = vmatpush.msra.mxu0 %v355
        %1490 = vmatpush.msra.mxu0 %v352
        %1491 = vmatmul.f32.gmra.mxu0 %v1344
        %v1492 = vpop.f32.mrf.mxu0
        %v1493 = vadd.f32 0.0, %v1492
        %1494 = vdwg.mxu0
        %1495 = vmatpush.msra.mxu0 %v445
        %1496 = vmatpush.msra.mxu0 %v442
        %1497 = vmatpush.msra.mxu0 %v439
        %1498 = vmatpush.msra.mxu0 %v436
        %1499 = vmatpush.msra.mxu0 %v433
        %1500 = vmatpush.msra.mxu0 %v430
        %1501 = vmatpush.msra.mxu0 %v427
        %1502 = vmatpush.msra.mxu0 %v424
        %1503 = vmatpush.msra.mxu0 %v421
        %1504 = vmatpush.msra.mxu0 %v418
        %1505 = vmatpush.msra.mxu0 %v415
        %1506 = vmatpush.msra.mxu0 %v412
        %1507 = vmatpush.msra.mxu0 %v409
        %1508 = vmatpush.msra.mxu0 %v406
        %1509 = vmatpush.msra.mxu0 %v403
        %1510 = vmatpush.msra.mxu0 %v400
        %1511 = vmatmul.f32.gmra.mxu0 %v1345
        %v1512 = vpop.f32.mrf.mxu0
        %v1513 = vadd.f32 %v1493, %v1512
        %1514 = vdwg.mxu0
        %1515 = vmatpush.msra.mxu0 %v493
        %1516 = vmatpush.msra.mxu0 %v490
        %1517 = vmatpush.msra.mxu0 %v487
        %1518 = vmatpush.msra.mxu0 %v484
        %1519 = vmatpush.msra.mxu0 %v481
        %1520 = vmatpush.msra.mxu0 %v478
        %1521 = vmatpush.msra.mxu0 %v475
        %1522 = vmatpush.msra.mxu0 %v472
        %1523 = vmatpush.msra.mxu0 %v469
        %1524 = vmatpush.msra.mxu0 %v466
        %1525 = vmatpush.msra.mxu0 %v463
        %1526 = vmatpush.msra.mxu0 %v460
        %1527 = vmatpush.msra.mxu0 %v457
        %1528 = vmatpush.msra.mxu0 %v454
        %1529 = vmatpush.msra.mxu0 %v451
        %1530 = vmatpush.msra.mxu0 %v448
        %1531 = vmatmul.f32.gmra.mxu0 %v1346
        %v1532 = vpop.f32.mrf.mxu0
        %v1533 = vadd.f32 %v1513, %v1532
        %1534 = vdwg.mxu0
        %v1543 = vrot.slane %v1348, 7
        %v1544 = vsel %vm695, %v1543, %v1347
        %v1545 = vrot.slane %v1349, 6
        %v1546 = vsel %vm698, %v1545, %v1544
        %v1547 = vrot.slane %v1350, 5
        %v1548 = vsel %vm701, %v1547, %v1546
        %v1549 = vrot.slane %v1351, 4
        %v1550 = vsel %vm704, %v1549, %v1548
        %v1551 = vrot.slane %v1352, 3
        %v1552 = vsel %vm707, %v1551, %v1550
        %v1553 = vrot.slane %v1353, 2
        %v1554 = vsel %vm710, %v1553, %v1552
        %v1555 = vrot.slane %v1354, 1
        %v1556 = vsel %vm713, %v1555, %v1554
        %v1557 = vsel %vm715, %v1556, 0
        %1559 = vmatpush.msra.mxu0 0.0
        %1560 = vmatpush.msra.mxu0 0.0
        %1561 = vmatpush.msra.mxu0 0.0
        %1562 = vmatpush.msra.mxu0 0.0
        %1563 = vmatpush.msra.mxu0 0.0
        %1564 = vmatpush.msra.mxu0 0.0
        %1565 = vmatpush.msra.mxu0 0.0
        %1566 = vmatpush.msra.mxu0 0.0
        %1567 = vmatpush.msra.mxu0 0.0
        %1568 = vmatpush.msra.mxu0 0.0
        %1569 = vmatpush.msra.mxu0 0.0
        %1570 = vmatpush.msra.mxu0 0.0
        %1571 = vmatpush.msra.mxu0 %v347
        %1572 = vmatpush.msra.mxu0 %v344
        %1573 = vmatpush.msra.mxu0 %v341
        %1574 = vmatpush.msra.mxu0 %v338
        %1575 = vmatmul.f32.gmra.mxu0 %v1557
        %v1576 = vpop.f32.mrf.mxu0
        %v1577 = vadd.f32 %v1413, %v1576
        %1578 = vdwg.mxu0
        %1579 = vmatpush.msra.mxu0 0.0
        %1580 = vmatpush.msra.mxu0 0.0
        %1581 = vmatpush.msra.mxu0 0.0
        %1582 = vmatpush.msra.mxu0 0.0
        %1583 = vmatpush.msra.mxu0 0.0
        %1584 = vmatpush.msra.mxu0 0.0
        %1585 = vmatpush.msra.mxu0 0.0
        %1586 = vmatpush.msra.mxu0 0.0
        %1587 = vmatpush.msra.mxu0 0.0
        %1588 = vmatpush.msra.mxu0 0.0
        %1589 = vmatpush.msra.mxu0 0.0
        %1590 = vmatpush.msra.mxu0 0.0
        %1591 = vmatpush.msra.mxu0 %v348
        %1592 = vmatpush.msra.mxu0 %v345
        %1593 = vmatpush.msra.mxu0 %v342
        %1594 = vmatpush.msra.mxu0 %v339
        %1595 = vmatmul.f32.gmra.mxu0 %v1557
        %v1596 = vpop.f32.mrf.mxu0
        %v1597 = vadd.f32 %v1473, %v1596
        %1598 = vdwg.mxu0
        %1599 = vmatpush.msra.mxu0 0.0
        %1600 = vmatpush.msra.mxu0 0.0
        %1601 = vmatpush.msra.mxu0 0.0
        %1602 = vmatpush.msra.mxu0 0.0
        %1603 = vmatpush.msra.mxu0 0.0
        %1604 = vmatpush.msra.mxu0 0.0
        %1605 = vmatpush.msra.mxu0 0.0
        %1606 = vmatpush.msra.mxu0 0.0
        %1607 = vmatpush.msra.mxu0 0.0
        %1608 = vmatpush.msra.mxu0 0.0
        %1609 = vmatpush.msra.mxu0 0.0
        %1610 = vmatpush.msra.mxu0 0.0
        %1611 = vmatpush.msra.mxu0 %v349
        %1612 = vmatpush.msra.mxu0 %v346
        %1613 = vmatpush.msra.mxu0 %v343
        %1614 = vmatpush.msra.mxu0 %v340
        %1615 = vmatmul.f32.gmra.mxu0 %v1557
        %v1616 = vpop.f32.mrf.mxu0
        %v1617 = vadd.f32 %v1533, %v1616
        %1618 = vdwg.mxu0
        %v1619 = vadd.f32 %v1577, %v779
        %v1620 = vadd.f32 %v1597, %v780
        %v1621 = vadd.f32 %v1617, %v781
        %v1622 = vtanh.pop %v1619
        %v1623 = vtanh.pop %v1620
        %v1624 = vtanh.pop %v1621
        %v1625 = vld [vmem:[%s300 + $0x4] sm:$0x1]
        %v1626 = vld [vmem:[%s300 + $0xc] sm:$0x1]
        %v1627 = vld [vmem:[%s300 + $0x14] sm:$0x1]
        %v1628 = vld [vmem:[%s300 + $0x1c] sm:$0x1]
        %v1629 = vld [vmem:[%s300 + $0x24] sm:$0x1]
        %v1630 = vld [vmem:[%s300 + $0x2c] sm:$0x1]
        %v1631 = vld [vmem:[%s300 + $0x34] sm:$0x1]
        %v1632 = vld [vmem:[%s300 + $0x3c] sm:$0x1]
        %1633 = vmatpush.msra.mxu0 %v395
        %1634 = vmatpush.msra.mxu0 %v392
        %1635 = vmatpush.msra.mxu0 %v389
        %1636 = vmatpush.msra.mxu0 %v386
        %1637 = vmatpush.msra.mxu0 %v383
        %1638 = vmatpush.msra.mxu0 %v380
        %1639 = vmatpush.msra.mxu0 %v377
        %1640 = vmatpush.msra.mxu0 %v374
        %1641 = vmatpush.msra.mxu0 %v371
        %1642 = vmatpush.msra.mxu0 %v368
        %1643 = vmatpush.msra.mxu0 %v365
        %1644 = vmatpush.msra.mxu0 %v362
        %1645 = vmatpush.msra.mxu0 %v359
        %1646 = vmatpush.msra.mxu0 %v356
        %1647 = vmatpush.msra.mxu0 %v353
        %1648 = vmatpush.msra.mxu0 %v350
        %1649 = vmatmul.f32.gmra.mxu0 %v1622
        %v1650 = vpop.f32.mrf.mxu0
        %v1651 = vadd.f32 0.0, %v1650
        %1652 = vdwg.mxu0
        %1653 = vmatpush.msra.mxu0 %v443
        %1654 = vmatpush.msra.mxu0 %v440
        %1655 = vmatpush.msra.mxu0 %v437
        %1656 = vmatpush.msra.mxu0 %v434
        %1657 = vmatpush.msra.mxu0 %v431
        %1658 = vmatpush.msra.mxu0 %v428
        %1659 = vmatpush.msra.mxu0 %v425
        %1660 = vmatpush.msra.mxu0 %v422
        %1661 = vmatpush.msra.mxu0 %v419
        %1662 = vmatpush.msra.mxu0 %v416
        %1663 = vmatpush.msra.mxu0 %v413
        %1664 = vmatpush.msra.mxu0 %v410
        %1665 = vmatpush.msra.mxu0 %v407
        %1666 = vmatpush.msra.mxu0 %v404
        %1667 = vmatpush.msra.mxu0 %v401
        %1668 = vmatpush.msra.mxu0 %v398
        %1669 = vmatmul.f32.gmra.mxu0 %v1623
        %v1670 = vpop.f32.mrf.mxu0
        %v1671 = vadd.f32 %v1651, %v1670
        %1672 = vdwg.mxu0
        %1673 = vmatpush.msra.mxu0 %v491
        %1674 = vmatpush.msra.mxu0 %v488
        %1675 = vmatpush.msra.mxu0 %v485
        %1676 = vmatpush.msra.mxu0 %v482
        %1677 = vmatpush.msra.mxu0 %v479
        %1678 = vmatpush.msra.mxu0 %v476
        %1679 = vmatpush.msra.mxu0 %v473
        %1680 = vmatpush.msra.mxu0 %v470
        %1681 = vmatpush.msra.mxu0 %v467
        %1682 = vmatpush.msra.mxu0 %v464
        %1683 = vmatpush.msra.mxu0 %v461
        %1684 = vmatpush.msra.mxu0 %v458
        %1685 = vmatpush.msra.mxu0 %v455
        %1686 = vmatpush.msra.mxu0 %v452
        %1687 = vmatpush.msra.mxu0 %v449
        %1688 = vmatpush.msra.mxu0 %v446
        %1689 = vmatmul.f32.gmra.mxu0 %v1624
        %v1690 = vpop.f32.mrf.mxu0
        %v1691 = vadd.f32 %v1671, %v1690
        %1692 = vdwg.mxu0
        %1693 = vmatpush.msra.mxu0 %v396
        %1694 = vmatpush.msra.mxu0 %v393
        %1695 = vmatpush.msra.mxu0 %v390
        %1696 = vmatpush.msra.mxu0 %v387
        %1697 = vmatpush.msra.mxu0 %v384
        %1698 = vmatpush.msra.mxu0 %v381
        %1699 = vmatpush.msra.mxu0 %v378
        %1700 = vmatpush.msra.mxu0 %v375
        %1701 = vmatpush.msra.mxu0 %v372
        %1702 = vmatpush.msra.mxu0 %v369
        %1703 = vmatpush.msra.mxu0 %v366
        %1704 = vmatpush.msra.mxu0 %v363
        %1705 = vmatpush.msra.mxu0 %v360
        %1706 = vmatpush.msra.mxu0 %v357
        %1707 = vmatpush.msra.mxu0 %v354
        %1708 = vmatpush.msra.mxu0 %v351
        %1709 = vmatmul.f32.gmra.mxu0 %v1622
        %v1710 = vpop.f32.mrf.mxu0
        %v1711 = vadd.f32 0.0, %v1710
        %1712 = vdwg.mxu0
        %1713 = vmatpush.msra.mxu0 %v444
        %1714 = vmatpush.msra.mxu0 %v441
        %1715 = vmatpush.msra.mxu0 %v438
        %1716 = vmatpush.msra.mxu0 %v435
        %1717 = vmatpush.msra.mxu0 %v432
        %1718 = vmatpush.msra.mxu0 %v429
        %1719 = vmatpush.msra.mxu0 %v426
        %1720 = vmatpush.msra.mxu0 %v423
        %1721 = vmatpush.msra.mxu0 %v420
        %1722 = vmatpush.msra.mxu0 %v417
        %1723 = vmatpush.msra.mxu0 %v414
        %1724 = vmatpush.msra.mxu0 %v411
        %1725 = vmatpush.msra.mxu0 %v408
        %1726 = vmatpush.msra.mxu0 %v405
        %1727 = vmatpush.msra.mxu0 %v402
        %1728 = vmatpush.msra.mxu0 %v399
        %1729 = vmatmul.f32.gmra.mxu0 %v1623
        %v1730 = vpop.f32.mrf.mxu0
        %v1731 = vadd.f32 %v1711, %v1730
        %1732 = vdwg.mxu0
        %1733 = vmatpush.msra.mxu0 %v492
        %1734 = vmatpush.msra.mxu0 %v489
        %1735 = vmatpush.msra.mxu0 %v486
        %1736 = vmatpush.msra.mxu0 %v483
        %1737 = vmatpush.msra.mxu0 %v480
        %1738 = vmatpush.msra.mxu0 %v477
        %1739 = vmatpush.msra.mxu0 %v474
        %1740 = vmatpush.msra.mxu0 %v471
        %1741 = vmatpush.msra.mxu0 %v468
        %1742 = vmatpush.msra.mxu0 %v465
        %1743 = vmatpush.msra.mxu0 %v462
        %1744 = vmatpush.msra.mxu0 %v459
        %1745 = vmatpush.msra.mxu0 %v456
        %1746 = vmatpush.msra.mxu0 %v453
        %1747 = vmatpush.msra.mxu0 %v450
        %1748 = vmatpush.msra.mxu0 %v447
        %1749 = vmatmul.f32.gmra.mxu0 %v1624
        %v1750 = vpop.f32.mrf.mxu0
        %v1751 = vadd.f32 %v1731, %v1750
        %1752 = vdwg.mxu0
        %1753 = vmatpush.msra.mxu0 %v397
        %1754 = vmatpush.msra.mxu0 %v394
        %1755 = vmatpush.msra.mxu0 %v391
        %1756 = vmatpush.msra.mxu0 %v388
        %1757 = vmatpush.msra.mxu0 %v385
        %1758 = vmatpush.msra.mxu0 %v382
        %1759 = vmatpush.msra.mxu0 %v379
        %1760 = vmatpush.msra.mxu0 %v376
        %1761 = vmatpush.msra.mxu0 %v373
        %1762 = vmatpush.msra.mxu0 %v370
        %1763 = vmatpush.msra.mxu0 %v367
        %1764 = vmatpush.msra.mxu0 %v364
        %1765 = vmatpush.msra.mxu0 %v361
        %1766 = vmatpush.msra.mxu0 %v358
        %1767 = vmatpush.msra.mxu0 %v355
        %1768 = vmatpush.msra.mxu0 %v352
        %1769 = vmatmul.f32.gmra.mxu0 %v1622
        %v1770 = vpop.f32.mrf.mxu0
        %v1771 = vadd.f32 0.0, %v1770
        %1772 = vdwg.mxu0
        %1773 = vmatpush.msra.mxu0 %v445
        %1774 = vmatpush.msra.mxu0 %v442
        %1775 = vmatpush.msra.mxu0 %v439
        %1776 = vmatpush.msra.mxu0 %v436
        %1777 = vmatpush.msra.mxu0 %v433
        %1778 = vmatpush.msra.mxu0 %v430
        %1779 = vmatpush.msra.mxu0 %v427
        %1780 = vmatpush.msra.mxu0 %v424
        %1781 = vmatpush.msra.mxu0 %v421
        %1782 = vmatpush.msra.mxu0 %v418
        %1783 = vmatpush.msra.mxu0 %v415
        %1784 = vmatpush.msra.mxu0 %v412
        %1785 = vmatpush.msra.mxu0 %v409
        %1786 = vmatpush.msra.mxu0 %v406
        %1787 = vmatpush.msra.mxu0 %v403
        %1788 = vmatpush.msra.mxu0 %v400
        %1789 = vmatmul.f32.gmra.mxu0 %v1623
        %v1790 = vpop.f32.mrf.mxu0
        %v1791 = vadd.f32 %v1771, %v1790
        %1792 = vdwg.mxu0
        %1793 = vmatpush.msra.mxu0 %v493
        %1794 = vmatpush.msra.mxu0 %v490
        %1795 = vmatpush.msra.mxu0 %v487
        %1796 = vmatpush.msra.mxu0 %v484
        %1797 = vmatpush.msra.mxu0 %v481
        %1798 = vmatpush.msra.mxu0 %v478
        %1799 = vmatpush.msra.mxu0 %v475
        %1800 = vmatpush.msra.mxu0 %v472
        %1801 = vmatpush.msra.mxu0 %v469
        %1802 = vmatpush.msra.mxu0 %v466
        %1803 = vmatpush.msra.mxu0 %v463
        %1804 = vmatpush.msra.mxu0 %v460
        %1805 = vmatpush.msra.mxu0 %v457
        %1806 = vmatpush.msra.mxu0 %v454
        %1807 = vmatpush.msra.mxu0 %v451
        %1808 = vmatpush.msra.mxu0 %v448
        %1809 = vmatmul.f32.gmra.mxu0 %v1624
        %v1810 = vpop.f32.mrf.mxu0
        %v1811 = vadd.f32 %v1791, %v1810
        %1812 = vdwg.mxu0
        %v1821 = vrot.slane %v1626, 7
        %v1822 = vsel %vm695, %v1821, %v1625
        %v1823 = vrot.slane %v1627, 6
        %v1824 = vsel %vm698, %v1823, %v1822
        %v1825 = vrot.slane %v1628, 5
        %v1826 = vsel %vm701, %v1825, %v1824
        %v1827 = vrot.slane %v1629, 4
        %v1828 = vsel %vm704, %v1827, %v1826
        %v1829 = vrot.slane %v1630, 3
        %v1830 = vsel %vm707, %v1829, %v1828
        %v1831 = vrot.slane %v1631, 2
        %v1832 = vsel %vm710, %v1831, %v1830
        %v1833 = vrot.slane %v1632, 1
        %v1834 = vsel %vm713, %v1833, %v1832
        %v1835 = vsel %vm715, %v1834, 0
        %1837 = vmatpush.msra.mxu0 0.0
        %1838 = vmatpush.msra.mxu0 0.0
        %1839 = vmatpush.msra.mxu0 0.0
        %1840 = vmatpush.msra.mxu0 0.0
        %1841 = vmatpush.msra.mxu0 0.0
        %1842 = vmatpush.msra.mxu0 0.0
        %1843 = vmatpush.msra.mxu0 0.0
        %1844 = vmatpush.msra.mxu0 0.0
        %1845 = vmatpush.msra.mxu0 0.0
        %1846 = vmatpush.msra.mxu0 0.0
        %1847 = vmatpush.msra.mxu0 0.0
        %1848 = vmatpush.msra.mxu0 0.0
        %1849 = vmatpush.msra.mxu0 %v347
        %1850 = vmatpush.msra.mxu0 %v344
        %1851 = vmatpush.msra.mxu0 %v341
        %1852 = vmatpush.msra.mxu0 %v338
        %1853 = vmatmul.f32.gmra.mxu0 %v1835
        %v1854 = vpop.f32.mrf.mxu0
        %v1855 = vadd.f32 %v1691, %v1854
        %1856 = vdwg.mxu0
        %1857 = vmatpush.msra.mxu0 0.0
        %1858 = vmatpush.msra.mxu0 0.0
        %1859 = vmatpush.msra.mxu0 0.0
        %1860 = vmatpush.msra.mxu0 0.0
        %1861 = vmatpush.msra.mxu0 0.0
        %1862 = vmatpush.msra.mxu0 0.0
        %1863 = vmatpush.msra.mxu0 0.0
        %1864 = vmatpush.msra.mxu0 0.0
        %1865 = vmatpush.msra.mxu0 0.0
        %1866 = vmatpush.msra.mxu0 0.0
        %1867 = vmatpush.msra.mxu0 0.0
        %1868 = vmatpush.msra.mxu0 0.0
        %1869 = vmatpush.msra.mxu0 %v348
        %1870 = vmatpush.msra.mxu0 %v345
        %1871 = vmatpush.msra.mxu0 %v342
        %1872 = vmatpush.msra.mxu0 %v339
        %1873 = vmatmul.f32.gmra.mxu0 %v1835
        %v1874 = vpop.f32.mrf.mxu0
        %v1875 = vadd.f32 %v1751, %v1874
        %1876 = vdwg.mxu0
        %1877 = vmatpush.msra.mxu0 0.0
        %1878 = vmatpush.msra.mxu0 0.0
        %1879 = vmatpush.msra.mxu0 0.0
        %1880 = vmatpush.msra.mxu0 0.0
        %1881 = vmatpush.msra.mxu0 0.0
        %1882 = vmatpush.msra.mxu0 0.0
        %1883 = vmatpush.msra.mxu0 0.0
        %1884 = vmatpush.msra.mxu0 0.0
        %1885 = vmatpush.msra.mxu0 0.0
        %1886 = vmatpush.msra.mxu0 0.0
        %1887 = vmatpush.msra.mxu0 0.0
        %1888 = vmatpush.msra.mxu0 0.0
        %1889 = vmatpush.msra.mxu0 %v349
        %1890 = vmatpush.msra.mxu0 %v346
        %1891 = vmatpush.msra.mxu0 %v343
        %1892 = vmatpush.msra.mxu0 %v340
        %1893 = vmatmul.f32.gmra.mxu0 %v1835
        %v1894 = vpop.f32.mrf.mxu0
        %v1895 = vadd.f32 %v1811, %v1894
        %1896 = vdwg.mxu0
        %v1897 = vadd.f32 %v1855, %v779
        %v1898 = vadd.f32 %v1875, %v780
        %v1899 = vadd.f32 %v1895, %v781
        %v1900 = vtanh.pop %v1897
        %v1901 = vtanh.pop %v1898
        %v1902 = vtanh.pop %v1899
        %v1903 = vld [vmem:[%s300 + $0x5] sm:$0x1]
        %v1904 = vld [vmem:[%s300 + $0xd] sm:$0x1]
        %v1905 = vld [vmem:[%s300 + $0x15] sm:$0x1]
        %v1906 = vld [vmem:[%s300 + $0x1d] sm:$0x1]
        %v1907 = vld [vmem:[%s300 + $0x25] sm:$0x1]
        %v1908 = vld [vmem:[%s300 + $0x2d] sm:$0x1]
        %v1909 = vld [vmem:[%s300 + $0x35] sm:$0x1]
        %v1910 = vld [vmem:[%s300 + $0x3d] sm:$0x1]
        %1911 = vmatpush.msra.mxu0 %v395
        %1912 = vmatpush.msra.mxu0 %v392
        %1913 = vmatpush.msra.mxu0 %v389
        %1914 = vmatpush.msra.mxu0 %v386
        %1915 = vmatpush.msra.mxu0 %v383
        %1916 = vmatpush.msra.mxu0 %v380
        %1917 = vmatpush.msra.mxu0 %v377
        %1918 = vmatpush.msra.mxu0 %v374
        %1919 = vmatpush.msra.mxu0 %v371
        %1920 = vmatpush.msra.mxu0 %v368
        %1921 = vmatpush.msra.mxu0 %v365
        %1922 = vmatpush.msra.mxu0 %v362
        %1923 = vmatpush.msra.mxu0 %v359
        %1924 = vmatpush.msra.mxu0 %v356
        %1925 = vmatpush.msra.mxu0 %v353
        %1926 = vmatpush.msra.mxu0 %v350
        %1927 = vmatmul.f32.gmra.mxu0 %v1900
        %v1928 = vpop.f32.mrf.mxu0
        %v1929 = vadd.f32 0.0, %v1928
        %1930 = vdwg.mxu0
        %1931 = vmatpush.msra.mxu0 %v443
        %1932 = vmatpush.msra.mxu0 %v440
        %1933 = vmatpush.msra.mxu0 %v437
        %1934 = vmatpush.msra.mxu0 %v434
        %1935 = vmatpush.msra.mxu0 %v431
        %1936 = vmatpush.msra.mxu0 %v428
        %1937 = vmatpush.msra.mxu0 %v425
        %1938 = vmatpush.msra.mxu0 %v422
        %1939 = vmatpush.msra.mxu0 %v419
        %1940 = vmatpush.msra.mxu0 %v416
        %1941 = vmatpush.msra.mxu0 %v413
        %1942 = vmatpush.msra.mxu0 %v410
        %1943 = vmatpush.msra.mxu0 %v407
        %1944 = vmatpush.msra.mxu0 %v404
        %1945 = vmatpush.msra.mxu0 %v401
        %1946 = vmatpush.msra.mxu0 %v398
        %1947 = vmatmul.f32.gmra.mxu0 %v1901
        %v1948 = vpop.f32.mrf.mxu0
        %v1949 = vadd.f32 %v1929, %v1948
        %1950 = vdwg.mxu0
        %1951 = vmatpush.msra.mxu0 %v491
        %1952 = vmatpush.msra.mxu0 %v488
        %1953 = vmatpush.msra.mxu0 %v485
        %1954 = vmatpush.msra.mxu0 %v482
        %1955 = vmatpush.msra.mxu0 %v479
        %1956 = vmatpush.msra.mxu0 %v476
        %1957 = vmatpush.msra.mxu0 %v473
        %1958 = vmatpush.msra.mxu0 %v470
        %1959 = vmatpush.msra.mxu0 %v467
        %1960 = vmatpush.msra.mxu0 %v464
        %1961 = vmatpush.msra.mxu0 %v461
        %1962 = vmatpush.msra.mxu0 %v458
        %1963 = vmatpush.msra.mxu0 %v455
        %1964 = vmatpush.msra.mxu0 %v452
        %1965 = vmatpush.msra.mxu0 %v449
        %1966 = vmatpush.msra.mxu0 %v446
        %1967 = vmatmul.f32.gmra.mxu0 %v1902
        %v1968 = vpop.f32.mrf.mxu0
        %v1969 = vadd.f32 %v1949, %v1968
        %1970 = vdwg.mxu0
        %1971 = vmatpush.msra.mxu0 %v396
        %1972 = vmatpush.msra.mxu0 %v393
        %1973 = vmatpush.msra.mxu0 %v390
        %1974 = vmatpush.msra.mxu0 %v387
        %1975 = vmatpush.msra.mxu0 %v384
        %1976 = vmatpush.msra.mxu0 %v381
        %1977 = vmatpush.msra.mxu0 %v378
        %1978 = vmatpush.msra.mxu0 %v375
        %1979 = vmatpush.msra.mxu0 %v372
        %1980 = vmatpush.msra.mxu0 %v369
        %1981 = vmatpush.msra.mxu0 %v366
        %1982 = vmatpush.msra.mxu0 %v363
        %1983 = vmatpush.msra.mxu0 %v360
        %1984 = vmatpush.msra.mxu0 %v357
        %1985 = vmatpush.msra.mxu0 %v354
        %1986 = vmatpush.msra.mxu0 %v351
        %1987 = vmatmul.f32.gmra.mxu0 %v1900
        %v1988 = vpop.f32.mrf.mxu0
        %v1989 = vadd.f32 0.0, %v1988
        %1990 = vdwg.mxu0
        %1991 = vmatpush.msra.mxu0 %v444
        %1992 = vmatpush.msra.mxu0 %v441
        %1993 = vmatpush.msra.mxu0 %v438
        %1994 = vmatpush.msra.mxu0 %v435
        %1995 = vmatpush.msra.mxu0 %v432
        %1996 = vmatpush.msra.mxu0 %v429
        %1997 = vmatpush.msra.mxu0 %v426
        %1998 = vmatpush.msra.mxu0 %v423
        %1999 = vmatpush.msra.mxu0 %v420
        %2000 = vmatpush.msra.mxu0 %v417
        %2001 = vmatpush.msra.mxu0 %v414
        %2002 = vmatpush.msra.mxu0 %v411
        %2003 = vmatpush.msra.mxu0 %v408
        %2004 = vmatpush.msra.mxu0 %v405
        %2005 = vmatpush.msra.mxu0 %v402
        %2006 = vmatpush.msra.mxu0 %v399
        %2007 = vmatmul.f32.gmra.mxu0 %v1901
        %v2008 = vpop.f32.mrf.mxu0
        %v2009 = vadd.f32 %v1989, %v2008
        %2010 = vdwg.mxu0
        %2011 = vmatpush.msra.mxu0 %v492
        %2012 = vmatpush.msra.mxu0 %v489
        %2013 = vmatpush.msra.mxu0 %v486
        %2014 = vmatpush.msra.mxu0 %v483
        %2015 = vmatpush.msra.mxu0 %v480
        %2016 = vmatpush.msra.mxu0 %v477
        %2017 = vmatpush.msra.mxu0 %v474
        %2018 = vmatpush.msra.mxu0 %v471
        %2019 = vmatpush.msra.mxu0 %v468
        %2020 = vmatpush.msra.mxu0 %v465
        %2021 = vmatpush.msra.mxu0 %v462
        %2022 = vmatpush.msra.mxu0 %v459
        %2023 = vmatpush.msra.mxu0 %v456
        %2024 = vmatpush.msra.mxu0 %v453
        %2025 = vmatpush.msra.mxu0 %v450
        %2026 = vmatpush.msra.mxu0 %v447
        %2027 = vmatmul.f32.gmra.mxu0 %v1902
        %v2028 = vpop.f32.mrf.mxu0
        %v2029 = vadd.f32 %v2009, %v2028
        %2030 = vdwg.mxu0
        %2031 = vmatpush.msra.mxu0 %v397
        %2032 = vmatpush.msra.mxu0 %v394
        %2033 = vmatpush.msra.mxu0 %v391
        %2034 = vmatpush.msra.mxu0 %v388
        %2035 = vmatpush.msra.mxu0 %v385
        %2036 = vmatpush.msra.mxu0 %v382
        %2037 = vmatpush.msra.mxu0 %v379
        %2038 = vmatpush.msra.mxu0 %v376
        %2039 = vmatpush.msra.mxu0 %v373
        %2040 = vmatpush.msra.mxu0 %v370
        %2041 = vmatpush.msra.mxu0 %v367
        %2042 = vmatpush.msra.mxu0 %v364
        %2043 = vmatpush.msra.mxu0 %v361
        %2044 = vmatpush.msra.mxu0 %v358
        %2045 = vmatpush.msra.mxu0 %v355
        %2046 = vmatpush.msra.mxu0 %v352
        %2047 = vmatmul.f32.gmra.mxu0 %v1900
        %v2048 = vpop.f32.mrf.mxu0
        %v2049 = vadd.f32 0.0, %v2048
        %2050 = vdwg.mxu0
        %2051 = vmatpush.msra.mxu0 %v445
        %2052 = vmatpush.msra.mxu0 %v442
        %2053 = vmatpush.msra.mxu0 %v439
        %2054 = vmatpush.msra.mxu0 %v436
        %2055 = vmatpush.msra.mxu0 %v433
        %2056 = vmatpush.msra.mxu0 %v430
        %2057 = vmatpush.msra.mxu0 %v427
        %2058 = vmatpush.msra.mxu0 %v424
        %2059 = vmatpush.msra.mxu0 %v421
        %2060 = vmatpush.msra.mxu0 %v418
        %2061 = vmatpush.msra.mxu0 %v415
        %2062 = vmatpush.msra.mxu0 %v412
        %2063 = vmatpush.msra.mxu0 %v409
        %2064 = vmatpush.msra.mxu0 %v406
        %2065 = vmatpush.msra.mxu0 %v403
        %2066 = vmatpush.msra.mxu0 %v400
        %2067 = vmatmul.f32.gmra.mxu0 %v1901
        %v2068 = vpop.f32.mrf.mxu0
        %v2069 = vadd.f32 %v2049, %v2068
        %2070 = vdwg.mxu0
        %2071 = vmatpush.msra.mxu0 %v493
        %2072 = vmatpush.msra.mxu0 %v490
        %2073 = vmatpush.msra.mxu0 %v487
        %2074 = vmatpush.msra.mxu0 %v484
        %2075 = vmatpush.msra.mxu0 %v481
        %2076 = vmatpush.msra.mxu0 %v478
        %2077 = vmatpush.msra.mxu0 %v475
        %2078 = vmatpush.msra.mxu0 %v472
        %2079 = vmatpush.msra.mxu0 %v469
        %2080 = vmatpush.msra.mxu0 %v466
        %2081 = vmatpush.msra.mxu0 %v463
        %2082 = vmatpush.msra.mxu0 %v460
        %2083 = vmatpush.msra.mxu0 %v457
        %2084 = vmatpush.msra.mxu0 %v454
        %2085 = vmatpush.msra.mxu0 %v451
        %2086 = vmatpush.msra.mxu0 %v448
        %2087 = vmatmul.f32.gmra.mxu0 %v1902
        %v2088 = vpop.f32.mrf.mxu0
        %v2089 = vadd.f32 %v2069, %v2088
        %2090 = vdwg.mxu0
        %v2099 = vrot.slane %v1904, 7
        %v2100 = vsel %vm695, %v2099, %v1903
        %v2101 = vrot.slane %v1905, 6
        %v2102 = vsel %vm698, %v2101, %v2100
        %v2103 = vrot.slane %v1906, 5
        %v2104 = vsel %vm701, %v2103, %v2102
        %v2105 = vrot.slane %v1907, 4
        %v2106 = vsel %vm704, %v2105, %v2104
        %v2107 = vrot.slane %v1908, 3
        %v2108 = vsel %vm707, %v2107, %v2106
        %v2109 = vrot.slane %v1909, 2
        %v2110 = vsel %vm710, %v2109, %v2108
        %v2111 = vrot.slane %v1910, 1
        %v2112 = vsel %vm713, %v2111, %v2110
        %v2113 = vsel %vm715, %v2112, 0
        %2115 = vmatpush.msra.mxu0 0.0
        %2116 = vmatpush.msra.mxu0 0.0
        %2117 = vmatpush.msra.mxu0 0.0
        %2118 = vmatpush.msra.mxu0 0.0
        %2119 = vmatpush.msra.mxu0 0.0
        %2120 = vmatpush.msra.mxu0 0.0
        %2121 = vmatpush.msra.mxu0 0.0
        %2122 = vmatpush.msra.mxu0 0.0
        %2123 = vmatpush.msra.mxu0 0.0
        %2124 = vmatpush.msra.mxu0 0.0
        %2125 = vmatpush.msra.mxu0 0.0
        %2126 = vmatpush.msra.mxu0 0.0
        %2127 = vmatpush.msra.mxu0 %v347
        %2128 = vmatpush.msra.mxu0 %v344
        %2129 = vmatpush.msra.mxu0 %v341
        %2130 = vmatpush.msra.mxu0 %v338
        %2131 = vmatmul.f32.gmra.mxu0 %v2113
        %v2132 = vpop.f32.mrf.mxu0
        %v2133 = vadd.f32 %v1969, %v2132
        %2134 = vdwg.mxu0
        %2135 = vmatpush.msra.mxu0 0.0
        %2136 = vmatpush.msra.mxu0 0.0
        %2137 = vmatpush.msra.mxu0 0.0
        %2138 = vmatpush.msra.mxu0 0.0
        %2139 = vmatpush.msra.mxu0 0.0
        %2140 = vmatpush.msra.mxu0 0.0
        %2141 = vmatpush.msra.mxu0 0.0
        %2142 = vmatpush.msra.mxu0 0.0
        %2143 = vmatpush.msra.mxu0 0.0
        %2144 = vmatpush.msra.mxu0 0.0
        %2145 = vmatpush.msra.mxu0 0.0
        %2146 = vmatpush.msra.mxu0 0.0
        %2147 = vmatpush.msra.mxu0 %v348
        %2148 = vmatpush.msra.mxu0 %v345
        %2149 = vmatpush.msra.mxu0 %v342
        %2150 = vmatpush.msra.mxu0 %v339
        %2151 = vmatmul.f32.gmra.mxu0 %v2113
        %v2152 = vpop.f32.mrf.mxu0
        %v2153 = vadd.f32 %v2029, %v2152
        %2154 = vdwg.mxu0
        %2155 = vmatpush.msra.mxu0 0.0
        %2156 = vmatpush.msra.mxu0 0.0
        %2157 = vmatpush.msra.mxu0 0.0
        %2158 = vmatpush.msra.mxu0 0.0
        %2159 = vmatpush.msra.mxu0 0.0
        %2160 = vmatpush.msra.mxu0 0.0
        %2161 = vmatpush.msra.mxu0 0.0
        %2162 = vmatpush.msra.mxu0 0.0
        %2163 = vmatpush.msra.mxu0 0.0
        %2164 = vmatpush.msra.mxu0 0.0
        %2165 = vmatpush.msra.mxu0 0.0
        %2166 = vmatpush.msra.mxu0 0.0
        %2167 = vmatpush.msra.mxu0 %v349
        %2168 = vmatpush.msra.mxu0 %v346
        %2169 = vmatpush.msra.mxu0 %v343
        %2170 = vmatpush.msra.mxu0 %v340
        %2171 = vmatmul.f32.gmra.mxu0 %v2113
        %v2172 = vpop.f32.mrf.mxu0
        %v2173 = vadd.f32 %v2089, %v2172
        %2174 = vdwg.mxu0
        %v2175 = vadd.f32 %v2133, %v779
        %v2176 = vadd.f32 %v2153, %v780
        %v2177 = vadd.f32 %v2173, %v781
        %v2178 = vtanh.pop %v2175
        %v2179 = vtanh.pop %v2176
        %v2180 = vtanh.pop %v2177
        %v2181 = vld [vmem:[%s300 + $0x6] sm:$0x1]
        %v2182 = vld [vmem:[%s300 + $0xe] sm:$0x1]
        %v2183 = vld [vmem:[%s300 + $0x16] sm:$0x1]
        %v2184 = vld [vmem:[%s300 + $0x1e] sm:$0x1]
        %v2185 = vld [vmem:[%s300 + $0x26] sm:$0x1]
        %v2186 = vld [vmem:[%s300 + $0x2e] sm:$0x1]
        %v2187 = vld [vmem:[%s300 + $0x36] sm:$0x1]
        %v2188 = vld [vmem:[%s300 + $0x3e] sm:$0x1]
        %2189 = vmatpush.msra.mxu0 %v395
        %2190 = vmatpush.msra.mxu0 %v392
        %2191 = vmatpush.msra.mxu0 %v389
        %2192 = vmatpush.msra.mxu0 %v386
        %2193 = vmatpush.msra.mxu0 %v383
        %2194 = vmatpush.msra.mxu0 %v380
        %2195 = vmatpush.msra.mxu0 %v377
        %2196 = vmatpush.msra.mxu0 %v374
        %2197 = vmatpush.msra.mxu0 %v371
        %2198 = vmatpush.msra.mxu0 %v368
        %2199 = vmatpush.msra.mxu0 %v365
        %2200 = vmatpush.msra.mxu0 %v362
        %2201 = vmatpush.msra.mxu0 %v359
        %2202 = vmatpush.msra.mxu0 %v356
        %2203 = vmatpush.msra.mxu0 %v353
        %2204 = vmatpush.msra.mxu0 %v350
        %2205 = vmatmul.f32.gmra.mxu0 %v2178
        %v2206 = vpop.f32.mrf.mxu0
        %v2207 = vadd.f32 0.0, %v2206
        %2208 = vdwg.mxu0
        %2209 = vmatpush.msra.mxu0 %v443
        %2210 = vmatpush.msra.mxu0 %v440
        %2211 = vmatpush.msra.mxu0 %v437
        %2212 = vmatpush.msra.mxu0 %v434
        %2213 = vmatpush.msra.mxu0 %v431
        %2214 = vmatpush.msra.mxu0 %v428
        %2215 = vmatpush.msra.mxu0 %v425
        %2216 = vmatpush.msra.mxu0 %v422
        %2217 = vmatpush.msra.mxu0 %v419
        %2218 = vmatpush.msra.mxu0 %v416
        %2219 = vmatpush.msra.mxu0 %v413
        %2220 = vmatpush.msra.mxu0 %v410
        %2221 = vmatpush.msra.mxu0 %v407
        %2222 = vmatpush.msra.mxu0 %v404
        %2223 = vmatpush.msra.mxu0 %v401
        %2224 = vmatpush.msra.mxu0 %v398
        %2225 = vmatmul.f32.gmra.mxu0 %v2179
        %v2226 = vpop.f32.mrf.mxu0
        %v2227 = vadd.f32 %v2207, %v2226
        %2228 = vdwg.mxu0
        %2229 = vmatpush.msra.mxu0 %v491
        %2230 = vmatpush.msra.mxu0 %v488
        %2231 = vmatpush.msra.mxu0 %v485
        %2232 = vmatpush.msra.mxu0 %v482
        %2233 = vmatpush.msra.mxu0 %v479
        %2234 = vmatpush.msra.mxu0 %v476
        %2235 = vmatpush.msra.mxu0 %v473
        %2236 = vmatpush.msra.mxu0 %v470
        %2237 = vmatpush.msra.mxu0 %v467
        %2238 = vmatpush.msra.mxu0 %v464
        %2239 = vmatpush.msra.mxu0 %v461
        %2240 = vmatpush.msra.mxu0 %v458
        %2241 = vmatpush.msra.mxu0 %v455
        %2242 = vmatpush.msra.mxu0 %v452
        %2243 = vmatpush.msra.mxu0 %v449
        %2244 = vmatpush.msra.mxu0 %v446
        %2245 = vmatmul.f32.gmra.mxu0 %v2180
        %v2246 = vpop.f32.mrf.mxu0
        %v2247 = vadd.f32 %v2227, %v2246
        %2248 = vdwg.mxu0
        %2249 = vmatpush.msra.mxu0 %v396
        %2250 = vmatpush.msra.mxu0 %v393
        %2251 = vmatpush.msra.mxu0 %v390
        %2252 = vmatpush.msra.mxu0 %v387
        %2253 = vmatpush.msra.mxu0 %v384
        %2254 = vmatpush.msra.mxu0 %v381
        %2255 = vmatpush.msra.mxu0 %v378
        %2256 = vmatpush.msra.mxu0 %v375
        %2257 = vmatpush.msra.mxu0 %v372
        %2258 = vmatpush.msra.mxu0 %v369
        %2259 = vmatpush.msra.mxu0 %v366
        %2260 = vmatpush.msra.mxu0 %v363
        %2261 = vmatpush.msra.mxu0 %v360
        %2262 = vmatpush.msra.mxu0 %v357
        %2263 = vmatpush.msra.mxu0 %v354
        %2264 = vmatpush.msra.mxu0 %v351
        %2265 = vmatmul.f32.gmra.mxu0 %v2178
        %v2266 = vpop.f32.mrf.mxu0
        %v2267 = vadd.f32 0.0, %v2266
        %2268 = vdwg.mxu0
        %2269 = vmatpush.msra.mxu0 %v444
        %2270 = vmatpush.msra.mxu0 %v441
        %2271 = vmatpush.msra.mxu0 %v438
        %2272 = vmatpush.msra.mxu0 %v435
        %2273 = vmatpush.msra.mxu0 %v432
        %2274 = vmatpush.msra.mxu0 %v429
        %2275 = vmatpush.msra.mxu0 %v426
        %2276 = vmatpush.msra.mxu0 %v423
        %2277 = vmatpush.msra.mxu0 %v420
        %2278 = vmatpush.msra.mxu0 %v417
        %2279 = vmatpush.msra.mxu0 %v414
        %2280 = vmatpush.msra.mxu0 %v411
        %2281 = vmatpush.msra.mxu0 %v408
        %2282 = vmatpush.msra.mxu0 %v405
        %2283 = vmatpush.msra.mxu0 %v402
        %2284 = vmatpush.msra.mxu0 %v399
        %2285 = vmatmul.f32.gmra.mxu0 %v2179
        %v2286 = vpop.f32.mrf.mxu0
        %v2287 = vadd.f32 %v2267, %v2286
        %2288 = vdwg.mxu0
        %2289 = vmatpush.msra.mxu0 %v492
        %2290 = vmatpush.msra.mxu0 %v489
        %2291 = vmatpush.msra.mxu0 %v486
        %2292 = vmatpush.msra.mxu0 %v483
        %2293 = vmatpush.msra.mxu0 %v480
        %2294 = vmatpush.msra.mxu0 %v477
        %2295 = vmatpush.msra.mxu0 %v474
        %2296 = vmatpush.msra.mxu0 %v471
        %2297 = vmatpush.msra.mxu0 %v468
        %2298 = vmatpush.msra.mxu0 %v465
        %2299 = vmatpush.msra.mxu0 %v462
        %2300 = vmatpush.msra.mxu0 %v459
        %2301 = vmatpush.msra.mxu0 %v456
        %2302 = vmatpush.msra.mxu0 %v453
        %2303 = vmatpush.msra.mxu0 %v450
        %2304 = vmatpush.msra.mxu0 %v447
        %2305 = vmatmul.f32.gmra.mxu0 %v2180
        %v2306 = vpop.f32.mrf.mxu0
        %v2307 = vadd.f32 %v2287, %v2306
        %2308 = vdwg.mxu0
        %2309 = vmatpush.msra.mxu0 %v397
        %2310 = vmatpush.msra.mxu0 %v394
        %2311 = vmatpush.msra.mxu0 %v391
        %2312 = vmatpush.msra.mxu0 %v388
        %2313 = vmatpush.msra.mxu0 %v385
        %2314 = vmatpush.msra.mxu0 %v382
        %2315 = vmatpush.msra.mxu0 %v379
        %2316 = vmatpush.msra.mxu0 %v376
        %2317 = vmatpush.msra.mxu0 %v373
        %2318 = vmatpush.msra.mxu0 %v370
        %2319 = vmatpush.msra.mxu0 %v367
        %2320 = vmatpush.msra.mxu0 %v364
        %2321 = vmatpush.msra.mxu0 %v361
        %2322 = vmatpush.msra.mxu0 %v358
        %2323 = vmatpush.msra.mxu0 %v355
        %2324 = vmatpush.msra.mxu0 %v352
        %2325 = vmatmul.f32.gmra.mxu0 %v2178
        %v2326 = vpop.f32.mrf.mxu0
        %v2327 = vadd.f32 0.0, %v2326
        %2328 = vdwg.mxu0
        %2329 = vmatpush.msra.mxu0 %v445
        %2330 = vmatpush.msra.mxu0 %v442
        %2331 = vmatpush.msra.mxu0 %v439
        %2332 = vmatpush.msra.mxu0 %v436
        %2333 = vmatpush.msra.mxu0 %v433
        %2334 = vmatpush.msra.mxu0 %v430
        %2335 = vmatpush.msra.mxu0 %v427
        %2336 = vmatpush.msra.mxu0 %v424
        %2337 = vmatpush.msra.mxu0 %v421
        %2338 = vmatpush.msra.mxu0 %v418
        %2339 = vmatpush.msra.mxu0 %v415
        %2340 = vmatpush.msra.mxu0 %v412
        %2341 = vmatpush.msra.mxu0 %v409
        %2342 = vmatpush.msra.mxu0 %v406
        %2343 = vmatpush.msra.mxu0 %v403
        %2344 = vmatpush.msra.mxu0 %v400
        %2345 = vmatmul.f32.gmra.mxu0 %v2179
        %v2346 = vpop.f32.mrf.mxu0
        %v2347 = vadd.f32 %v2327, %v2346
        %2348 = vdwg.mxu0
        %2349 = vmatpush.msra.mxu0 %v493
        %2350 = vmatpush.msra.mxu0 %v490
        %2351 = vmatpush.msra.mxu0 %v487
        %2352 = vmatpush.msra.mxu0 %v484
        %2353 = vmatpush.msra.mxu0 %v481
        %2354 = vmatpush.msra.mxu0 %v478
        %2355 = vmatpush.msra.mxu0 %v475
        %2356 = vmatpush.msra.mxu0 %v472
        %2357 = vmatpush.msra.mxu0 %v469
        %2358 = vmatpush.msra.mxu0 %v466
        %2359 = vmatpush.msra.mxu0 %v463
        %2360 = vmatpush.msra.mxu0 %v460
        %2361 = vmatpush.msra.mxu0 %v457
        %2362 = vmatpush.msra.mxu0 %v454
        %2363 = vmatpush.msra.mxu0 %v451
        %2364 = vmatpush.msra.mxu0 %v448
        %2365 = vmatmul.f32.gmra.mxu0 %v2180
        %v2366 = vpop.f32.mrf.mxu0
        %v2367 = vadd.f32 %v2347, %v2366
        %2368 = vdwg.mxu0
        %v2377 = vrot.slane %v2182, 7
        %v2378 = vsel %vm695, %v2377, %v2181
        %v2379 = vrot.slane %v2183, 6
        %v2380 = vsel %vm698, %v2379, %v2378
        %v2381 = vrot.slane %v2184, 5
        %v2382 = vsel %vm701, %v2381, %v2380
        %v2383 = vrot.slane %v2185, 4
        %v2384 = vsel %vm704, %v2383, %v2382
        %v2385 = vrot.slane %v2186, 3
        %v2386 = vsel %vm707, %v2385, %v2384
        %v2387 = vrot.slane %v2187, 2
        %v2388 = vsel %vm710, %v2387, %v2386
        %v2389 = vrot.slane %v2188, 1
        %v2390 = vsel %vm713, %v2389, %v2388
        %v2391 = vsel %vm715, %v2390, 0
        %2393 = vmatpush.msra.mxu0 0.0
        %2394 = vmatpush.msra.mxu0 0.0
        %2395 = vmatpush.msra.mxu0 0.0
        %2396 = vmatpush.msra.mxu0 0.0
        %2397 = vmatpush.msra.mxu0 0.0
        %2398 = vmatpush.msra.mxu0 0.0
        %2399 = vmatpush.msra.mxu0 0.0
        %2400 = vmatpush.msra.mxu0 0.0
        %2401 = vmatpush.msra.mxu0 0.0
        %2402 = vmatpush.msra.mxu0 0.0
        %2403 = vmatpush.msra.mxu0 0.0
        %2404 = vmatpush.msra.mxu0 0.0
        %2405 = vmatpush.msra.mxu0 %v347
        %2406 = vmatpush.msra.mxu0 %v344
        %2407 = vmatpush.msra.mxu0 %v341
        %2408 = vmatpush.msra.mxu0 %v338
        %2409 = vmatmul.f32.gmra.mxu0 %v2391
        %v2410 = vpop.f32.mrf.mxu0
        %v2411 = vadd.f32 %v2247, %v2410
        %2412 = vdwg.mxu0
        %2413 = vmatpush.msra.mxu0 0.0
        %2414 = vmatpush.msra.mxu0 0.0
        %2415 = vmatpush.msra.mxu0 0.0
        %2416 = vmatpush.msra.mxu0 0.0
        %2417 = vmatpush.msra.mxu0 0.0
        %2418 = vmatpush.msra.mxu0 0.0
        %2419 = vmatpush.msra.mxu0 0.0
        %2420 = vmatpush.msra.mxu0 0.0
        %2421 = vmatpush.msra.mxu0 0.0
        %2422 = vmatpush.msra.mxu0 0.0
        %2423 = vmatpush.msra.mxu0 0.0
        %2424 = vmatpush.msra.mxu0 0.0
        %2425 = vmatpush.msra.mxu0 %v348
        %2426 = vmatpush.msra.mxu0 %v345
        %2427 = vmatpush.msra.mxu0 %v342
        %2428 = vmatpush.msra.mxu0 %v339
        %2429 = vmatmul.f32.gmra.mxu0 %v2391
        %v2430 = vpop.f32.mrf.mxu0
        %v2431 = vadd.f32 %v2307, %v2430
        %2432 = vdwg.mxu0
        %2433 = vmatpush.msra.mxu0 0.0
        %2434 = vmatpush.msra.mxu0 0.0
        %2435 = vmatpush.msra.mxu0 0.0
        %2436 = vmatpush.msra.mxu0 0.0
        %2437 = vmatpush.msra.mxu0 0.0
        %2438 = vmatpush.msra.mxu0 0.0
        %2439 = vmatpush.msra.mxu0 0.0
        %2440 = vmatpush.msra.mxu0 0.0
        %2441 = vmatpush.msra.mxu0 0.0
        %2442 = vmatpush.msra.mxu0 0.0
        %2443 = vmatpush.msra.mxu0 0.0
        %2444 = vmatpush.msra.mxu0 0.0
        %2445 = vmatpush.msra.mxu0 %v349
        %2446 = vmatpush.msra.mxu0 %v346
        %2447 = vmatpush.msra.mxu0 %v343
        %2448 = vmatpush.msra.mxu0 %v340
        %2449 = vmatmul.f32.gmra.mxu0 %v2391
        %v2450 = vpop.f32.mrf.mxu0
        %v2451 = vadd.f32 %v2367, %v2450
        %2452 = vdwg.mxu0
        %v2453 = vadd.f32 %v2411, %v779
        %v2454 = vadd.f32 %v2431, %v780
        %v2455 = vadd.f32 %v2451, %v781
        %v2456 = vtanh.pop %v2453
        %v2457 = vtanh.pop %v2454
        %v2458 = vtanh.pop %v2455
        %v2459 = vld [vmem:[%s300 + $0x7] sm:$0x1]
        %v2460 = vld [vmem:[%s300 + $0xf] sm:$0x1]
        %v2461 = vld [vmem:[%s300 + $0x17] sm:$0x1]
        %v2462 = vld [vmem:[%s300 + $0x1f] sm:$0x1]
        %v2463 = vld [vmem:[%s300 + $0x27] sm:$0x1]
        %v2464 = vld [vmem:[%s300 + $0x2f] sm:$0x1]
        %v2465 = vld [vmem:[%s300 + $0x37] sm:$0x1]
        %v2466 = vld [vmem:[%s300 + $0x3f] sm:$0x1]
        %2467 = vmatpush.msra.mxu0 %v395
        %2468 = vmatpush.msra.mxu0 %v392
        %2469 = vmatpush.msra.mxu0 %v389
        %2470 = vmatpush.msra.mxu0 %v386
        %2471 = vmatpush.msra.mxu0 %v383
        %2472 = vmatpush.msra.mxu0 %v380
        %2473 = vmatpush.msra.mxu0 %v377
        %2474 = vmatpush.msra.mxu0 %v374
        %2475 = vmatpush.msra.mxu0 %v371
        %2476 = vmatpush.msra.mxu0 %v368
        %2477 = vmatpush.msra.mxu0 %v365
        %2478 = vmatpush.msra.mxu0 %v362
        %2479 = vmatpush.msra.mxu0 %v359
        %2480 = vmatpush.msra.mxu0 %v356
        %2481 = vmatpush.msra.mxu0 %v353
        %2482 = vmatpush.msra.mxu0 %v350
        %2483 = vmatmul.f32.gmra.mxu0 %v2456
        %v2484 = vpop.f32.mrf.mxu0
        %v2485 = vadd.f32 0.0, %v2484
        %2486 = vdwg.mxu0
        %2487 = vmatpush.msra.mxu0 %v443
        %2488 = vmatpush.msra.mxu0 %v440
        %2489 = vmatpush.msra.mxu0 %v437
        %2490 = vmatpush.msra.mxu0 %v434
        %2491 = vmatpush.msra.mxu0 %v431
        %2492 = vmatpush.msra.mxu0 %v428
        %2493 = vmatpush.msra.mxu0 %v425
        %2494 = vmatpush.msra.mxu0 %v422
        %2495 = vmatpush.msra.mxu0 %v419
        %2496 = vmatpush.msra.mxu0 %v416
        %2497 = vmatpush.msra.mxu0 %v413
        %2498 = vmatpush.msra.mxu0 %v410
        %2499 = vmatpush.msra.mxu0 %v407
        %2500 = vmatpush.msra.mxu0 %v404
        %2501 = vmatpush.msra.mxu0 %v401
        %2502 = vmatpush.msra.mxu0 %v398
        %2503 = vmatmul.f32.gmra.mxu0 %v2457
        %v2504 = vpop.f32.mrf.mxu0
        %v2505 = vadd.f32 %v2485, %v2504
        %2506 = vdwg.mxu0
        %2507 = vmatpush.msra.mxu0 %v491
        %2508 = vmatpush.msra.mxu0 %v488
        %2509 = vmatpush.msra.mxu0 %v485
        %2510 = vmatpush.msra.mxu0 %v482
        %2511 = vmatpush.msra.mxu0 %v479
        %2512 = vmatpush.msra.mxu0 %v476
        %2513 = vmatpush.msra.mxu0 %v473
        %2514 = vmatpush.msra.mxu0 %v470
        %2515 = vmatpush.msra.mxu0 %v467
        %2516 = vmatpush.msra.mxu0 %v464
        %2517 = vmatpush.msra.mxu0 %v461
        %2518 = vmatpush.msra.mxu0 %v458
        %2519 = vmatpush.msra.mxu0 %v455
        %2520 = vmatpush.msra.mxu0 %v452
        %2521 = vmatpush.msra.mxu0 %v449
        %2522 = vmatpush.msra.mxu0 %v446
        %2523 = vmatmul.f32.gmra.mxu0 %v2458
        %v2524 = vpop.f32.mrf.mxu0
        %v2525 = vadd.f32 %v2505, %v2524
        %2526 = vdwg.mxu0
        %2527 = vmatpush.msra.mxu0 %v396
        %2528 = vmatpush.msra.mxu0 %v393
        %2529 = vmatpush.msra.mxu0 %v390
        %2530 = vmatpush.msra.mxu0 %v387
        %2531 = vmatpush.msra.mxu0 %v384
        %2532 = vmatpush.msra.mxu0 %v381
        %2533 = vmatpush.msra.mxu0 %v378
        %2534 = vmatpush.msra.mxu0 %v375
        %2535 = vmatpush.msra.mxu0 %v372
        %2536 = vmatpush.msra.mxu0 %v369
        %2537 = vmatpush.msra.mxu0 %v366
        %2538 = vmatpush.msra.mxu0 %v363
        %2539 = vmatpush.msra.mxu0 %v360
        %2540 = vmatpush.msra.mxu0 %v357
        %2541 = vmatpush.msra.mxu0 %v354
        %2542 = vmatpush.msra.mxu0 %v351
        %2543 = vmatmul.f32.gmra.mxu0 %v2456
        %v2544 = vpop.f32.mrf.mxu0
        %v2545 = vadd.f32 0.0, %v2544
        %2546 = vdwg.mxu0
        %2547 = vmatpush.msra.mxu0 %v444
        %2548 = vmatpush.msra.mxu0 %v441
        %2549 = vmatpush.msra.mxu0 %v438
        %2550 = vmatpush.msra.mxu0 %v435
        %2551 = vmatpush.msra.mxu0 %v432
        %2552 = vmatpush.msra.mxu0 %v429
        %2553 = vmatpush.msra.mxu0 %v426
        %2554 = vmatpush.msra.mxu0 %v423
        %2555 = vmatpush.msra.mxu0 %v420
        %2556 = vmatpush.msra.mxu0 %v417
        %2557 = vmatpush.msra.mxu0 %v414
        %2558 = vmatpush.msra.mxu0 %v411
        %2559 = vmatpush.msra.mxu0 %v408
        %2560 = vmatpush.msra.mxu0 %v405
        %2561 = vmatpush.msra.mxu0 %v402
        %2562 = vmatpush.msra.mxu0 %v399
        %2563 = vmatmul.f32.gmra.mxu0 %v2457
        %v2564 = vpop.f32.mrf.mxu0
        %v2565 = vadd.f32 %v2545, %v2564
        %2566 = vdwg.mxu0
        %2567 = vmatpush.msra.mxu0 %v492
        %2568 = vmatpush.msra.mxu0 %v489
        %2569 = vmatpush.msra.mxu0 %v486
        %2570 = vmatpush.msra.mxu0 %v483
        %2571 = vmatpush.msra.mxu0 %v480
        %2572 = vmatpush.msra.mxu0 %v477
        %2573 = vmatpush.msra.mxu0 %v474
        %2574 = vmatpush.msra.mxu0 %v471
        %2575 = vmatpush.msra.mxu0 %v468
        %2576 = vmatpush.msra.mxu0 %v465
        %2577 = vmatpush.msra.mxu0 %v462
        %2578 = vmatpush.msra.mxu0 %v459
        %2579 = vmatpush.msra.mxu0 %v456
        %2580 = vmatpush.msra.mxu0 %v453
        %2581 = vmatpush.msra.mxu0 %v450
        %2582 = vmatpush.msra.mxu0 %v447
        %2583 = vmatmul.f32.gmra.mxu0 %v2458
        %v2584 = vpop.f32.mrf.mxu0
        %v2585 = vadd.f32 %v2565, %v2584
        %2586 = vdwg.mxu0
        %2587 = vmatpush.msra.mxu0 %v397
        %2588 = vmatpush.msra.mxu0 %v394
        %2589 = vmatpush.msra.mxu0 %v391
        %2590 = vmatpush.msra.mxu0 %v388
        %2591 = vmatpush.msra.mxu0 %v385
        %2592 = vmatpush.msra.mxu0 %v382
        %2593 = vmatpush.msra.mxu0 %v379
        %2594 = vmatpush.msra.mxu0 %v376
        %2595 = vmatpush.msra.mxu0 %v373
        %2596 = vmatpush.msra.mxu0 %v370
        %2597 = vmatpush.msra.mxu0 %v367
        %2598 = vmatpush.msra.mxu0 %v364
        %2599 = vmatpush.msra.mxu0 %v361
        %2600 = vmatpush.msra.mxu0 %v358
        %2601 = vmatpush.msra.mxu0 %v355
        %2602 = vmatpush.msra.mxu0 %v352
        %2603 = vmatmul.f32.gmra.mxu0 %v2456
        %v2604 = vpop.f32.mrf.mxu0
        %v2605 = vadd.f32 0.0, %v2604
        %2606 = vdwg.mxu0
        %2607 = vmatpush.msra.mxu0 %v445
        %2608 = vmatpush.msra.mxu0 %v442
        %2609 = vmatpush.msra.mxu0 %v439
        %2610 = vmatpush.msra.mxu0 %v436
        %2611 = vmatpush.msra.mxu0 %v433
        %2612 = vmatpush.msra.mxu0 %v430
        %2613 = vmatpush.msra.mxu0 %v427
        %2614 = vmatpush.msra.mxu0 %v424
        %2615 = vmatpush.msra.mxu0 %v421
        %2616 = vmatpush.msra.mxu0 %v418
        %2617 = vmatpush.msra.mxu0 %v415
        %2618 = vmatpush.msra.mxu0 %v412
        %2619 = vmatpush.msra.mxu0 %v409
        %2620 = vmatpush.msra.mxu0 %v406
        %2621 = vmatpush.msra.mxu0 %v403
        %2622 = vmatpush.msra.mxu0 %v400
        %2623 = vmatmul.f32.gmra.mxu0 %v2457
        %v2624 = vpop.f32.mrf.mxu0
        %v2625 = vadd.f32 %v2605, %v2624
        %2626 = vdwg.mxu0
        %2627 = vmatpush.msra.mxu0 %v493
        %2628 = vmatpush.msra.mxu0 %v490
        %2629 = vmatpush.msra.mxu0 %v487
        %2630 = vmatpush.msra.mxu0 %v484
        %2631 = vmatpush.msra.mxu0 %v481
        %2632 = vmatpush.msra.mxu0 %v478
        %2633 = vmatpush.msra.mxu0 %v475
        %2634 = vmatpush.msra.mxu0 %v472
        %2635 = vmatpush.msra.mxu0 %v469
        %2636 = vmatpush.msra.mxu0 %v466
        %2637 = vmatpush.msra.mxu0 %v463
        %2638 = vmatpush.msra.mxu0 %v460
        %2639 = vmatpush.msra.mxu0 %v457
        %2640 = vmatpush.msra.mxu0 %v454
        %2641 = vmatpush.msra.mxu0 %v451
        %2642 = vmatpush.msra.mxu0 %v448
        %2643 = vmatmul.f32.gmra.mxu0 %v2458
        %v2644 = vpop.f32.mrf.mxu0
        %v2645 = vadd.f32 %v2625, %v2644
        %2646 = vdwg.mxu0
        %v2655 = vrot.slane %v2460, 7
        %v2656 = vsel %vm695, %v2655, %v2459
        %v2657 = vrot.slane %v2461, 6
        %v2658 = vsel %vm698, %v2657, %v2656
        %v2659 = vrot.slane %v2462, 5
        %v2660 = vsel %vm701, %v2659, %v2658
        %v2661 = vrot.slane %v2463, 4
        %v2662 = vsel %vm704, %v2661, %v2660
        %v2663 = vrot.slane %v2464, 3
        %v2664 = vsel %vm707, %v2663, %v2662
        %v2665 = vrot.slane %v2465, 2
        %v2666 = vsel %vm710, %v2665, %v2664
        %v2667 = vrot.slane %v2466, 1
        %v2668 = vsel %vm713, %v2667, %v2666
        %v2669 = vsel %vm715, %v2668, 0
        %2671 = vmatpush.msra.mxu0 0.0
        %2672 = vmatpush.msra.mxu0 0.0
        %2673 = vmatpush.msra.mxu0 0.0
        %2674 = vmatpush.msra.mxu0 0.0
        %2675 = vmatpush.msra.mxu0 0.0
        %2676 = vmatpush.msra.mxu0 0.0
        %2677 = vmatpush.msra.mxu0 0.0
        %2678 = vmatpush.msra.mxu0 0.0
        %2679 = vmatpush.msra.mxu0 0.0
        %2680 = vmatpush.msra.mxu0 0.0
        %2681 = vmatpush.msra.mxu0 0.0
        %2682 = vmatpush.msra.mxu0 0.0
        %2683 = vmatpush.msra.mxu0 %v347
        %2684 = vmatpush.msra.mxu0 %v344
        %2685 = vmatpush.msra.mxu0 %v341
        %2686 = vmatpush.msra.mxu0 %v338
        %2687 = vmatmul.f32.gmra.mxu0 %v2669
        %v2688 = vpop.f32.mrf.mxu0
        %v2689 = vadd.f32 %v2525, %v2688
        %2690 = vdwg.mxu0
        %2691 = vmatpush.msra.mxu0 0.0
        %2692 = vmatpush.msra.mxu0 0.0
        %2693 = vmatpush.msra.mxu0 0.0
        %2694 = vmatpush.msra.mxu0 0.0
        %2695 = vmatpush.msra.mxu0 0.0
        %2696 = vmatpush.msra.mxu0 0.0
        %2697 = vmatpush.msra.mxu0 0.0
        %2698 = vmatpush.msra.mxu0 0.0
        %2699 = vmatpush.msra.mxu0 0.0
        %2700 = vmatpush.msra.mxu0 0.0
        %2701 = vmatpush.msra.mxu0 0.0
        %2702 = vmatpush.msra.mxu0 0.0
        %2703 = vmatpush.msra.mxu0 %v348
        %2704 = vmatpush.msra.mxu0 %v345
        %2705 = vmatpush.msra.mxu0 %v342
        %2706 = vmatpush.msra.mxu0 %v339
        %2707 = vmatmul.f32.gmra.mxu0 %v2669
        %v2708 = vpop.f32.mrf.mxu0
        %v2709 = vadd.f32 %v2585, %v2708
        %2710 = vdwg.mxu0
        %2711 = vmatpush.msra.mxu0 0.0
        %2712 = vmatpush.msra.mxu0 0.0
        %2713 = vmatpush.msra.mxu0 0.0
        %2714 = vmatpush.msra.mxu0 0.0
        %2715 = vmatpush.msra.mxu0 0.0
        %2716 = vmatpush.msra.mxu0 0.0
        %2717 = vmatpush.msra.mxu0 0.0
        %2718 = vmatpush.msra.mxu0 0.0
        %2719 = vmatpush.msra.mxu0 0.0
        %2720 = vmatpush.msra.mxu0 0.0
        %2721 = vmatpush.msra.mxu0 0.0
        %2722 = vmatpush.msra.mxu0 0.0
        %2723 = vmatpush.msra.mxu0 %v349
        %2724 = vmatpush.msra.mxu0 %v346
        %2725 = vmatpush.msra.mxu0 %v343
        %2726 = vmatpush.msra.mxu0 %v340
        %2727 = vmatmul.f32.gmra.mxu0 %v2669
        %v2728 = vpop.f32.mrf.mxu0
        %v2729 = vadd.f32 %v2645, %v2728
        %2730 = vdwg.mxu0
        %v2731 = vadd.f32 %v2689, %v779
        %v2732 = vadd.f32 %v2709, %v780
        %v2733 = vadd.f32 %v2729, %v781
        %v2734 = vtanh.pop %v2731
        %v2735 = vtanh.pop %v2732
        %v2736 = vtanh.pop %v2733
        %2737 = vst [vmem:[#allocation2] sm:$0xff] %v2734
        %2738 = vst [vmem:[#allocation2 + $0x8] sm:$0xff] %v2735
        %2739 = vst [vmem:[#allocation2 + $0x10] sm:$0xff] %v2736
        %p2740 = scmp.eq.s32.totalorder %s22, 1
        // Predicated region
        $region87: #{_lambda_.1} parent=77 // pred_check
          %p2741 = pneg %p2740
        $region88: #{_lambda_.1} parent=77 // pred_check_branch
          %2743 = sbr.rel (%p2741) target = $region90
        $region89: #{_lambda_.1} parent=77 // pred_region
          %v2744 = vld [vmem:[%s4] sm:$0xff]
          %v2745 = vld [vmem:[%s4 + $0x8] sm:$0xff]
          %v2746 = vld [vmem:[%s4 + $0x10] sm:$0xff]
          %v2747 = vld [vmem:[%s4 + $0x18] sm:$0xff]
          %v2748 = vld [vmem:[%s4 + $0x20] sm:$0xff]
          %v2749 = vld [vmem:[%s4 + $0x28] sm:$0xff]
          %v2750 = vld [vmem:[%s4 + $0x30] sm:$0xff]
          %v2751 = vld [vmem:[%s4 + $0x38] sm:$0xff]
          %v2752 = vld [vmem:[%s4 + $0x40] sm:$0xff]
          %v2753 = vld [vmem:[%s4 + $0x48] sm:$0xff]
          %v2754 = vld [vmem:[%s4 + $0x50] sm:$0xff]
          %v2755 = vld [vmem:[%s4 + $0x58] sm:$0xff]
          %v2756 = vld [vmem:[%s4 + $0x60] sm:$0xff]
          %v2757 = vld [vmem:[%s4 + $0x68] sm:$0xff]
          %v2758 = vld [vmem:[%s4 + $0x70] sm:$0xff]
          %v2759 = vld [vmem:[%s4 + $0x78] sm:$0xff]
          %v2760 = vld [vmem:[%s4 + $0x80] sm:$0xff]
          %v2761 = vld [vmem:[%s4 + $0x88] sm:$0xff]
          %v2762 = vld [vmem:[%s4 + $0x90] sm:$0xff]
          %v2763 = vld [vmem:[%s4 + $0x98] sm:$0xff]
          %v2764 = vld [vmem:[%s4 + $0xa0] sm:$0xff]
          %v2765 = vld [vmem:[%s4 + $0xa8] sm:$0xff]
          %v2766 = vld [vmem:[%s4 + $0xb0] sm:$0xff]
          %v2767 = vld [vmem:[%s4 + $0xb8] sm:$0xff]
          %v2768 = vld [vmem:[%s4 + $0xc0] sm:$0xff]
          %v2769 = vld [vmem:[%s4 + $0xc8] sm:$0xff]
          %v2770 = vld [vmem:[%s4 + $0xd0] sm:$0xff]
          %v2771 = vld [vmem:[%s4 + $0xd8] sm:$0xff]
          %v2772 = vld [vmem:[%s4 + $0xe0] sm:$0xff]
          %v2773 = vld [vmem:[%s4 + $0xe8] sm:$0xff]
          %v2774 = vld [vmem:[%s4 + $0xf0] sm:$0xff]
          %v2775 = vld [vmem:[%s4 + $0xf8] sm:$0xff]
          %v2776 = vld [vmem:[%s4 + $0x100] sm:$0xff]
          %v2777 = vld [vmem:[%s4 + $0x108] sm:$0xff]
          %v2778 = vld [vmem:[%s4 + $0x110] sm:$0xff]
          %v2779 = vld [vmem:[%s4 + $0x118] sm:$0xff]
          %v2780 = vld [vmem:[%s4 + $0x120] sm:$0xff]
          %v2781 = vld [vmem:[%s4 + $0x128] sm:$0xff]
          %v2782 = vld [vmem:[%s4 + $0x130] sm:$0xff]
          %v2783 = vld [vmem:[%s4 + $0x138] sm:$0xff]
          %v2784 = vld [vmem:[%s4 + $0x140] sm:$0xff]
          %v2785 = vld [vmem:[%s4 + $0x148] sm:$0xff]
          %v2786 = vld [vmem:[%s4 + $0x150] sm:$0xff]
          %v2787 = vld [vmem:[%s4 + $0x158] sm:$0xff]
          %v2788 = vld [vmem:[%s4 + $0x160] sm:$0xff]
          %v2789 = vld [vmem:[%s4 + $0x168] sm:$0xff]
          %v2790 = vld [vmem:[%s4 + $0x170] sm:$0xff]
          %v2791 = vld [vmem:[%s4 + $0x178] sm:$0xff]
          %v2792 = vld [vmem:[%s5] sm:$0x1]
          %v2794 = vperm.slane %v2792, 0
          %2796 = vmatpush.msra.mxu0 %v2759
          %2797 = vmatpush.msra.mxu0 %v2758
          %2798 = vmatpush.msra.mxu0 %v2757
          %2799 = vmatpush.msra.mxu0 %v2756
          %2800 = vmatpush.msra.mxu0 %v2755
          %2801 = vmatpush.msra.mxu0 %v2754
          %2802 = vmatpush.msra.mxu0 %v2753
          %2803 = vmatpush.msra.mxu0 %v2752
          %2804 = vmatpush.msra.mxu0 %v2751
          %2805 = vmatpush.msra.mxu0 %v2750
          %2806 = vmatpush.msra.mxu0 %v2749
          %2807 = vmatpush.msra.mxu0 %v2748
          %2808 = vmatpush.msra.mxu0 %v2747
          %2809 = vmatpush.msra.mxu0 %v2746
          %2810 = vmatpush.msra.mxu0 %v2745
          %2811 = vmatpush.msra.mxu0 %v2744
          %2812 = vmatmul.f32.gmra.mxu0 %v2734
          %v2813 = vpop.f32.mrf.mxu0
          %v2814 = vadd.f32 %v2794, %v2813
          %2815 = vdwg.mxu0
          %2816 = vmatpush.msra.mxu0 %v2775
          %2817 = vmatpush.msra.mxu0 %v2774
          %2818 = vmatpush.msra.mxu0 %v2773
          %2819 = vmatpush.msra.mxu0 %v2772
          %2820 = vmatpush.msra.mxu0 %v2771
          %2821 = vmatpush.msra.mxu0 %v2770
          %2822 = vmatpush.msra.mxu0 %v2769
          %2823 = vmatpush.msra.mxu0 %v2768
          %2824 = vmatpush.msra.mxu0 %v2767
          %2825 = vmatpush.msra.mxu0 %v2766
          %2826 = vmatpush.msra.mxu0 %v2765
          %2827 = vmatpush.msra.mxu0 %v2764
          %2828 = vmatpush.msra.mxu0 %v2763
          %2829 = vmatpush.msra.mxu0 %v2762
          %2830 = vmatpush.msra.mxu0 %v2761
          %2831 = vmatpush.msra.mxu0 %v2760
          %2832 = vmatmul.f32.gmra.mxu0 %v2735
          %v2833 = vpop.f32.mrf.mxu0
          %v2834 = vadd.f32 %v2814, %v2833
          %2835 = vdwg.mxu0
          %2836 = vmatpush.msra.mxu0 %v2791
          %2837 = vmatpush.msra.mxu0 %v2790
          %2838 = vmatpush.msra.mxu0 %v2789
          %2839 = vmatpush.msra.mxu0 %v2788
          %2840 = vmatpush.msra.mxu0 %v2787
          %2841 = vmatpush.msra.mxu0 %v2786
          %2842 = vmatpush.msra.mxu0 %v2785
          %2843 = vmatpush.msra.mxu0 %v2784
          %2844 = vmatpush.msra.mxu0 %v2783
          %2845 = vmatpush.msra.mxu0 %v2782
          %2846 = vmatpush.msra.mxu0 %v2781
          %2847 = vmatpush.msra.mxu0 %v2780
          %2848 = vmatpush.msra.mxu0 %v2779
          %2849 = vmatpush.msra.mxu0 %v2778
          %2850 = vmatpush.msra.mxu0 %v2777
          %2851 = vmatpush.msra.mxu0 %v2776
          %2852 = vmatmul.f32.gmra.mxu0 %v2736
          %v2853 = vpop.f32.mrf.mxu0
          %v2854 = vadd.f32 %v2834, %v2853
          %2855 = vdwg.mxu0
          %vm2856 = vcmask 31744
          %v2857 = vsel %vm2856, %v2854, -inf
          %2858 = vmax.xlane.f32.xlu0 %v2857
          %v2859 = vpop.xlane.xlu0 %2858
          %v2860 = vsub.f32 %v2854, %v2859
          %v2861 = vmul.f32 %v2860, 1.442695
          %v2862 = vpow.pop %v2861
          %v2863 = vsel %vm2856, %v2862, 0.0
          %2864 = vadd.xlane.f32.xlu0 %v2863
          %v2865 = vpop.xlane.xlu0 %2864
          %v2866 = vrcp.pop %v2865
          %v2867 = vmul.f32 %v2865, %v2866
          %v2868 = vsub.f32 1.0, %v2867
          %v2869 = vmul.f32 %v2866, %v2868
          %v2870 = vadd.f32 %v2866, %v2869
          %vm2871 = vweird.f32 %v2865
          %vm2872 = vweird.f32 %v2866
          %vm2873 = vmor %vm2871, %vm2872
          %v2874 = vsel %vm2873, %v2866, %v2870
          %v2875 = vand.u32 2147483647, %v2865
          %vm2876 = vcmp.eq.f32.partialorder %v2875, 8.507059e+37
          %v2877 = vand.u32 %v2865, 2147483648
          %v2878 = vor.u32 1.1754944e-38, %v2877
          %v2879 = vsel %vm2876, %v2878, %v2874
          %v2880 = vmul.f32 %v2862, %v2879
          %2881 = vst.msk [vmem:[%s330] sm:$0xff] %vm2856, %v2880
        $region90: #{_lambda_.1} parent=77 // pred_fallthru
          _
        %p2882 = scmp.lt.s32.totalorder %s21, 0
        %s2883 = scalar_select %p2882, %s21, 0
        %s2884 = smul.addr %s2883, 8
        %s2885 = scalar_lea.vmem %s6, %s2884
        // Predicated region
        $region91: #{_lambda_.1} parent=77 // pred_check
          %p2886 = pneg %p180
        $region92: #{_lambda_.1} parent=77 // pred_check_branch
          %2888 = sbr.rel (%p2886) target = $region94
        $region93: #{_lambda_.1} parent=77 // pred_region
          _
        $region94: #{_lambda_.1} parent=77 // pred_fallthru
          _
        // Predicated region
        $region95: #{_lambda_.1} parent=77 // pred_check
          %p2889 = pneg %p180
        $region96: #{_lambda_.1} parent=77 // pred_check_branch
          %2891 = sbr.rel (%p2889) target = $region98
        $region97: #{_lambda_.1} parent=77 // pred_region
          %p2892 = scmp.lt.s32.totalorder %s21, 0
          %s2893 = scalar_select %p2892, %s21, 0
          %s2894 = smul.addr %s2893, 8
          %s2895 = scalar_lea.vmem %s6, %s2894
        $region98: #{_lambda_.1} parent=77 // pred_fallthru
          _
      $region78: #{_lambda_.1} parent=5 // pred_fallthru
        _
      %p2896 = scmp.le.s32.totalorder 2, %s12
      // Predicated region
      $region99: #{_lambda_.1} parent=5 // pred_check
        %p2897 = pneg %p2896
      $region100: #{_lambda_.1} parent=5 // pred_check_branch
        %2899 = sbr.rel (%p2897) target = $region102
      $region101: #{_lambda_.1} parent=5 // pred_region
        %s2900 = ssub.s32 %s12, 2
      $region102: #{_lambda_.1} parent=5 // pred_fallthru
        _
    $region6: #{_lambda_.1} parent=1 // loop_footer
      %s16 = sadd.s32 1, %s12
    $region7: #{_lambda_.1} parent=1 // loop_footer_branch
      %11 = sbr.rel target = $region3
    $region8: #{_lambda_.1} parent=1 // loop_exit
      _

</llo_original>
